<compile_context>
chip_gen: v7x
topology: tpu7x:2x2x1
jax: 0.10.0
libtpu: 0.0.40
codegen_flags: <defaults>
</compile_context>

<pallas_src>
import functools

import jax
import jax.numpy as jnp
from jax.experimental import pallas as pl
from jax.experimental.pallas import tpu as pltpu

MATMUL_DTYPE = jnp.bfloat16   # MXU operand dtype; accumulation is always f32
MASK_BIAS = -1e9              # HF extended-attention-mask additive bias on padded keys
NPAD = 128                    # lane-dense padded classifier width (sliced back in JAX)
NVEC = 10                     # packed per-layer bias/LN vectors


# ----------------------------------------------------------------------------- in-kernel helpers

def _layernorm(x, g, b, eps):
    mean = jnp.mean(x, axis=-1, keepdims=True)
    var = jnp.mean(jnp.square(x - mean), axis=-1, keepdims=True)
    return (x - mean) * jax.lax.rsqrt(var + eps) * g + b


def _gelu(x):
    # exact (erf) GELU, matching PyTorch/HF default "gelu"
    return 0.5 * x * (1.0 + jax.lax.erf(x * 0.7071067811865476))


# ----------------------------------------------------------------------------- fused stack kernel

def _roberta_stack_kernel(
        emb_ref, kb_ref, embln_ref,
        wq_ref, wk_ref, wv_ref, wo_ref, wi_ref, wf_ref, vec_ref,
        clsw_ref, clsb_ref,
        out_ref,
        hid_ref,
        *, num_heads, head_dim, hidden, inter, eps):
    """One grid step = (batch element b, layer l).  Hidden is carried in VMEM across l."""
    l = pl.program_id(1)
    n_layers = pl.num_programs(1)
    H, I = hidden, inter
    cdt = wq_ref.dtype                                        # MXU operand dtype

    # ---- l == 0 prologue: embedding LayerNorm into the VMEM hidden carry ----
    @pl.when(l == 0)
    def _():
        hid_ref[...] = _layernorm(emb_ref[...], embln_ref[0:1, :], embln_ref[1:2, :], eps)

    x = hid_ref[...]                                          # [S, H] f32

    # per-layer weights / packed vectors for this layer
    wq = wq_ref[0]; wk = wk_ref[0]; wv = wv_ref[0]; wo = wo_ref[0]
    wi = wi_ref[0]; wf = wf_ref[0]
    vec = vec_ref[0]                                          # [NVEC, max(H, I)] f32
    bq = vec[0:1, :H]; bk = vec[1:2, :H]; bv = vec[2:3, :H]; bo = vec[3:4, :H]
    g1 = vec[4:5, :H]; b1 = vec[5:6, :H]
    bi = vec[6:7, :I]; bf = vec[7:8, :H]
    g2 = vec[8:9, :H]; b2 = vec[9:10, :H]

    # ---- QKV projections (1/sqrt(Dh) already folded into wq/bq by pack_params) ----
    xc = x.astype(cdt)
    q = jnp.dot(xc, wq, preferred_element_type=jnp.float32) + bq
    k = jnp.dot(xc, wk, preferred_element_type=jnp.float32) + bk
    v = jnp.dot(xc, wv, preferred_element_type=jnp.float32) + bv

    maskb = kb_ref[0]                                         # [1, S] key bias, bcast rows

    # ---- linear attention: probs = sigmoid(QK^T/sqrt(Dh) + mask); ctx = probs @ V ----
    # Heads are contiguous lane slices; contexts stay in registers and are concatenated
    # once on the lane axis (no VMEM scratch, no masked partial stores).
    ctxs = []
    for h in range(num_heads):
        sl = slice(h * head_dim, (h + 1) * head_dim)
        qh = q[:, sl].astype(cdt)
        kh = k[:, sl].astype(cdt)
        vh = v[:, sl].astype(cdt)
        scores = jax.lax.dot_general(qh, kh, (((1,), (1,)), ((), ())),
                                     preferred_element_type=jnp.float32)   # [S, S]
        probs = jax.nn.sigmoid(scores + maskb)                # sigmoid replaces softmax
        ctxs.append(jnp.dot(probs.astype(cdt), vh, preferred_element_type=jnp.float32))
    ctx = jnp.concatenate(ctxs, axis=-1)                      # [S, H] lane-dense

    # ---- output projection + residual + LayerNorm (f32) ----
    attn_out = jnp.dot(ctx.astype(cdt), wo, preferred_element_type=jnp.float32) + bo
    h1 = _layernorm(attn_out + x, g1, b1, eps)

    # ---- FFN: dense -> GELU -> dense, residual + LayerNorm (f32) ----
    inter_act = _gelu(jnp.dot(h1.astype(cdt), wi, preferred_element_type=jnp.float32) + bi)
    ffn_out = jnp.dot(inter_act.astype(cdt), wf, preferred_element_type=jnp.float32) + bf
    h2 = _layernorm(ffn_out + h1, g2, b2, eps)

    hid_ref[...] = h2                                         # carry to next layer

    # ---- l == last epilogue: token-classification head (lane-dense padded output) ----
    @pl.when(l == n_layers - 1)
    def _():
        out_ref[...] = (jnp.dot(h2.astype(cdt), clsw_ref[...],
                                preferred_element_type=jnp.float32) + clsb_ref[...])


def pallas_roberta_stack(emb, key_bias3, packed, *, batch, seq, cfg):
    """emb: [B*S, H] f32 (pre-LN embedding sum), key_bias3: [B, 1, S] f32 -> [B*S, NPAD] f32."""
    H, I, L, S = cfg.hidden, cfg.intermediate, cfg.num_layers, seq
    VW = max(H, I)

    kernel = functools.partial(
        _roberta_stack_kernel,
        num_heads=cfg.num_heads, head_dim=cfg.head_dim,
        hidden=H, inter=I, eps=cfg.layer_norm_eps)

    def layer_block(shape):    # per-layer stacked weight, selected by layer grid index
        return pl.BlockSpec((1,) + shape, lambda b, l: (l, 0, 0))

    def resident(shape):       # constant index_map: stays resident across grid steps
        return pl.BlockSpec(shape, lambda b, l: (0, 0))

    # TODO(synk): at real RoBERTa sizes (H=768, I=3072, S=512), set vmem_limit_bytes,
    # mark constant weight blocks pipeline_mode=pl.Buffered(1) and tile the query axis.
    return pl.pallas_call(
        kernel,
        out_shape=jax.ShapeDtypeStruct((batch * S, NPAD), jnp.float32),
        grid=(batch, L),
        in_specs=[
            pl.BlockSpec((S, H), lambda b, l: (b, 0)),          # embeddings of batch b
            pl.BlockSpec((1, 1, S), lambda b, l: (b, 0, 0)),    # key mask bias of batch b
            resident((2, H)),                                   # emb LN gamma/beta
            layer_block((H, H)),                                # wq (pre-scaled)
            layer_block((H, H)),                                # wk
            layer_block((H, H)),                                # wv
            layer_block((H, H)),                                # wo
            layer_block((H, I)),                                # wi
            layer_block((I, H)),                                # wf
            layer_block((NVEC, VW)),                            # packed bias/LN vectors
            resident((H, NPAD)),                                # classifier weight (padded)
            resident((1, NPAD)),                                # classifier bias (padded)
        ],
        out_specs=pl.BlockSpec((S, NPAD), lambda b, l: (b, 0)),
        scratch_shapes=[pltpu.VMEM((S, H), jnp.float32)],       # hidden carried across layers
        compiler_params=pltpu.CompilerParams(
            dimension_semantics=("parallel", "arbitrary")),
    )(emb, key_bias3, packed["emb_ln"],
      packed["wq"], packed["wk"], packed["wv"], packed["wo"],
      packed["wi"], packed["wf"], packed["vecs"],
      packed["cls_w"], packed["cls_b"])


# ----------------------------------------------------------------------------- model

class Config:
    vocab_size = 100
    hidden = 32
    num_heads = 2
    head_dim = 16          # hidden // num_heads
    intermediate = 64
    num_layers = 2
    max_position = 64
    type_vocab = 1
    num_classes = 10
    pad_token_id = 1
    layer_norm_eps = 1e-5
    init_std = 0.02


def init_params(key, cfg):
    """Deterministic synthetic parameters (RoBERTa-style init), raw f32."""
    params = {}

    def nrm(k, shape):
        return cfg.init_std * jax.random.normal(k, shape, dtype=jnp.float32)

    keys = iter(jax.random.split(key, 8 + cfg.num_layers * 16))

    params["word_emb"] = nrm(next(keys), (cfg.vocab_size, cfg.hidden))
    params["pos_emb"] = nrm(next(keys), (cfg.max_position, cfg.hidden))
    params["type_emb"] = nrm(next(keys), (cfg.type_vocab, cfg.hidden))
    params["emb_ln_g"] = jnp.ones((cfg.hidden,), jnp.float32)
    params["emb_ln_b"] = jnp.zeros((cfg.hidden,), jnp.float32)

    layers = []
    for _ in range(cfg.num_layers):
        lyr = {
            # stored as [in, out] (equivalent to PyTorch nn.Linear weight.T)
            "wq": nrm(next(keys), (cfg.hidden, cfg.hidden)),
            "bq": jnp.zeros((cfg.hidden,), jnp.float32),
            "wk": nrm(next(keys), (cfg.hidden, cfg.hidden)),
            "bk": jnp.zeros((cfg.hidden,), jnp.float32),
            "wv": nrm(next(keys), (cfg.hidden, cfg.hidden)),
            "bv": jnp.zeros((cfg.hidden,), jnp.float32),
            "wo": nrm(next(keys), (cfg.hidden, cfg.hidden)),
            "bo": jnp.zeros((cfg.hidden,), jnp.float32),
            "attn_ln_g": jnp.ones((cfg.hidden,), jnp.float32),
            "attn_ln_b": jnp.zeros((cfg.hidden,), jnp.float32),
            "wi": nrm(next(keys), (cfg.hidden, cfg.intermediate)),
            "bi": jnp.zeros((cfg.intermediate,), jnp.float32),
            "wf": nrm(next(keys), (cfg.intermediate, cfg.hidden)),
            "bf": jnp.zeros((cfg.hidden,), jnp.float32),
            "out_ln_g": jnp.ones((cfg.hidden,), jnp.float32),
            "out_ln_b": jnp.zeros((cfg.hidden,), jnp.float32),
        }
        layers.append(lyr)
    params["layers"] = layers

    params["cls_w"] = nrm(next(keys), (cfg.hidden, cfg.num_classes))
    params["cls_b"] = jnp.zeros((cfg.num_classes,), jnp.float32)
    return params


def pack_params(params, cfg):
    """One-time packing: fold scale into Q, cast weights to bf16, stack per-layer weights
    as [L, ...], pack the 10 tiny bias/LN vectors per layer into one [L, 10, max(H,I)]
    slab, and lane-pad the classifier to NPAD columns."""
    H, I = cfg.hidden, cfg.intermediate
    assert H == cfg.num_heads * cfg.head_dim
    cdt = MATMUL_DTYPE
    scale = 1.0 / float(cfg.head_dim) ** 0.5
    VW = max(H, I)

    def pad_row(v):
        return jnp.pad(v, (0, VW - v.shape[0]))

    layers = params["layers"]
    packed = {
        "wq": jnp.stack([l["wq"] * scale for l in layers]).astype(cdt),
        "wk": jnp.stack([l["wk"] for l in layers]).astype(cdt),
        "wv": jnp.stack([l["wv"] for l in layers]).astype(cdt),
        "wo": jnp.stack([l["wo"] for l in layers]).astype(cdt),
        "wi": jnp.stack([l["wi"] for l in layers]).astype(cdt),
        "wf": jnp.stack([l["wf"] for l in layers]).astype(cdt),
        "vecs": jnp.stack([
            jnp.stack([pad_row(l["bq"] * scale), pad_row(l["bk"]), pad_row(l["bv"]),
                       pad_row(l["bo"]), pad_row(l["attn_ln_g"]), pad_row(l["attn_ln_b"]),
                       pad_row(l["bi"]), pad_row(l["bf"]),
                       pad_row(l["out_ln_g"]), pad_row(l["out_ln_b"])])
            for l in layers]),                                           # [L, NVEC, VW] f32
        "emb_ln": jnp.stack([params["emb_ln_g"], params["emb_ln_b"]]),   # [2, H] f32
        "cls_w": jnp.zeros((H, NPAD), cdt).at[:, :cfg.num_classes].set(
            params["cls_w"].astype(cdt)),
        "cls_b": jnp.zeros((1, NPAD), jnp.float32).at[0, :cfg.num_classes].set(
            params["cls_b"]),
        "word_emb": params["word_emb"],
        "pos_emb": params["pos_emb"],
        "type_emb": params["type_emb"],
    }
    return packed


def forward(packed, input_ids, cfg):
    B, S = input_ids.shape
    H = cfg.hidden

    # --- embeddings (gather glue stays in plain JAX) ---
    # TODO(synk): word/position/type embedding gathers left in plain JAX (not worth a
    # DMA-gather kernel at these sizes).
    pad_mask = (input_ids != cfg.pad_token_id)
    mask_i = pad_mask.astype(jnp.int32)
    position_ids = jnp.cumsum(mask_i, axis=1) * mask_i + cfg.pad_token_id   # RoBERTa-style
    token_type_ids = jnp.zeros_like(input_ids)

    emb = (packed["word_emb"][input_ids]
           + packed["pos_emb"][position_ids]
           + packed["type_emb"][token_type_ids]).reshape(B * S, H)          # [B*S, H] f32

    # Extended attention mask (HF semantics): large negative bias on padded keys, applied
    # before the sigmoid.  Kept as [B, 1, S]; broadcast over query rows inside the kernel.
    key_bias3 = ((1.0 - pad_mask.astype(jnp.float32)) * MASK_BIAS).reshape(B, 1, S)

    # One fused pallas_call: emb-LN -> L encoder layers (hidden carried in VMEM) -> classifier.
    logits_pad = pallas_roberta_stack(emb, key_bias3, packed, batch=B, seq=S, cfg=cfg)
    return logits_pad[:, :cfg.num_classes].reshape(B, S, cfg.num_classes)


# ----------------------------------------------------------------------------- pure-JAX reference

def reference_forward(params, input_ids, cfg):
    B, S = input_ids.shape
    H, Hn, Dh = cfg.hidden, cfg.num_heads, cfg.head_dim
    pad_mask = (input_ids != cfg.pad_token_id)
    mask_i = pad_mask.astype(jnp.int32)
    position_ids = jnp.cumsum(mask_i, axis=1) * mask_i + cfg.pad_token_id
    emb = (params["word_emb"][input_ids] + params["pos_emb"][position_ids]
           + params["type_emb"][jnp.zeros_like(input_ids)])

    def ln(x, g, b):
        m = x.mean(-1, keepdims=True)
        v = ((x - m) ** 2).mean(-1, keepdims=True)
        return (x - m) * jax.lax.rsqrt(v + cfg.layer_norm_eps) * g + b

    h = ln(emb, params["emb_ln_g"], params["emb_ln_b"])                     # [B, S, H]
    key_bias = (1.0 - pad_mask.astype(jnp.float32)) * MASK_BIAS             # [B, S]
    scale = 1.0 / float(Dh) ** 0.5
    for lyr in params["layers"]:
        q = h @ lyr["wq"] + lyr["bq"]
        k = h @ lyr["wk"] + lyr["bk"]
        v = h @ lyr["wv"] + lyr["bv"]

        def split(t):
            return t.reshape(B, S, Hn, Dh).transpose(0, 2, 1, 3)

        qh, kh, vh = split(q), split(k), split(v)
        scores = jnp.einsum("bhqd,bhkd->bhqk", qh, kh) * scale
        scores = scores + key_bias[:, None, None, :]
        probs = jax.nn.sigmoid(scores)
        ctx = jnp.einsum("bhqk,bhkd->bhqd", probs, vh)
        ctx = ctx.transpose(0, 2, 1, 3).reshape(B, S, H)
        h = ln(ctx @ lyr["wo"] + lyr["bo"] + h, lyr["attn_ln_g"], lyr["attn_ln_b"])
        inter = h @ lyr["wi"] + lyr["bi"]
        inter = 0.5 * inter * (1.0 + jax.lax.erf(inter * 0.7071067811865476))
        h = ln(inter @ lyr["wf"] + lyr["bf"] + h, lyr["out_ln_g"], lyr["out_ln_b"])
    return h @ params["cls_w"] + params["cls_b"]


# ----------------------------------------------------------------------------- main

if __name__ == "__main__":
    cfg = Config()
    key = jax.random.PRNGKey(0)
    k_params, k_ids = jax.random.split(key)

    params = init_params(k_params, cfg)
    packed = pack_params(params, cfg)        # one-time fold/cast/stack (not per call)

    B, S = 2, 8
    # token ids in [2, vocab) so none collide with pad_token_id=1; pad the tail of the
    # second sequence to exercise the attention-mask path.
    input_ids = jax.random.randint(k_ids, (B, S), 2, cfg.vocab_size, dtype=jnp.int32)
    input_ids = input_ids.at[1, S - 2:].set(cfg.pad_token_id)

    logits = jax.jit(functools.partial(forward, cfg=cfg))(packed, input_ids)
    jax.block_until_ready(logits)

    assert logits.shape == (B, S, cfg.num_classes)
    assert logits.dtype == jnp.float32

    # sanity check against the pure-JAX f32 reference (loose tol: bf16 MXU operands)
    ref = reference_forward(params, input_ids, cfg)
    max_err = float(jnp.max(jnp.abs(logits - ref)))
    assert max_err < 5e-2, f"max abs error {max_err}"

    print("KERNEL_OK")
</pallas_src>

<mosaic_0001>
module attributes {stable_mosaic.version = 11 : i64} {
  func.func @_roberta_stack_kernel(%arg0: i32, %arg1: i32, %arg2: memref<8x32xf32, #tpu.memory_space<vmem>>, %arg3: memref<1x1x8xf32, #tpu.memory_space<vmem>>, %arg4: memref<2x32xf32, #tpu.memory_space<vmem>>, %arg5: memref<1x32x32xbf16, #tpu.memory_space<vmem>>, %arg6: memref<1x32x32xbf16, #tpu.memory_space<vmem>>, %arg7: memref<1x32x32xbf16, #tpu.memory_space<vmem>>, %arg8: memref<1x32x32xbf16, #tpu.memory_space<vmem>>, %arg9: memref<1x32x64xbf16, #tpu.memory_space<vmem>>, %arg10: memref<1x64x32xbf16, #tpu.memory_space<vmem>>, %arg11: memref<1x10x64xf32, #tpu.memory_space<vmem>>, %arg12: memref<32x128xbf16, #tpu.memory_space<vmem>>, %arg13: memref<1x128xf32, #tpu.memory_space<vmem>>, %arg14: memref<8x128xf32, #tpu.memory_space<vmem>>, %arg15: memref<8x32xf32, #tpu.memory_space<vmem>>) attributes {dimension_semantics = [#tpu.dimension_semantics<parallel>, #tpu.dimension_semantics<arbitrary>], iteration_bounds = array<i64: 2, 2>, scalar_prefetch = 0 : i64, scratch_operands = 1 : i64, tpu.core_type = #tpu.core_type<tc>, window_params = [{transform_indices = @transform_0, window_bounds = array<i64: 8, 32>}, {transform_indices = @transform_1, window_bounds = array<i64: 1, 1, 8>}, {pipeline_mode = #tpu.pipeline_mode<synchronous>, transform_indices = @transform_2, window_bounds = array<i64: 2, 32>}, {transform_indices = @transform_3, window_bounds = array<i64: 1, 32, 32>}, {transform_indices = @transform_4, window_bounds = array<i64: 1, 32, 32>}, {transform_indices = @transform_5, window_bounds = array<i64: 1, 32, 32>}, {transform_indices = @transform_6, window_bounds = array<i64: 1, 32, 32>}, {transform_indices = @transform_7, window_bounds = array<i64: 1, 32, 64>}, {transform_indices = @transform_8, window_bounds = array<i64: 1, 64, 32>}, {transform_indices = @transform_9, window_bounds = array<i64: 1, 10, 64>}, {pipeline_mode = #tpu.pipeline_mode<synchronous>, transform_indices = @transform_10, window_bounds = array<i64: 32, 128>}, {pipeline_mode = #tpu.pipeline_mode<synchronous>, transform_indices = @transform_11, window_bounds = array<i64: 1, 128>}, {transform_indices = @transform_12, window_bounds = array<i64: 8, 128>}]} {
    %c0_i32 = arith.constant 0 : i32
    %0 = arith.cmpi eq, %arg1, %c0_i32 : i32
    %1 = arith.extui %0 : i1 to i32
    %c0_i32_0 = arith.constant 0 : i32
    %2 = arith.cmpi ne, %1, %c0_i32_0 : i32
    scf.if %2 {
      %c0_53 = arith.constant 0 : index
      %c0_54 = arith.constant 0 : index
      %143 = vector.load %arg2[%c0_53, %c0_54] : memref<8x32xf32, #tpu.memory_space<vmem>>, vector<8x32xf32>
      %c0_55 = arith.constant 0 : index
      %c0_56 = arith.constant 0 : index
      %144 = vector.load %arg4[%c0_55, %c0_56] : memref<2x32xf32, #tpu.memory_space<vmem>>, vector<1x32xf32>
      %c1 = arith.constant 1 : index
      %c0_57 = arith.constant 0 : index
      %145 = vector.load %arg4[%c1, %c0_57] : memref<2x32xf32, #tpu.memory_space<vmem>>, vector<1x32xf32>
      %cst_58 = arith.constant dense<0.000000e+00> : vector<8xf32>
      %146 = vector.multi_reduction <add>, %143, %cst_58 [1] : vector<8x32xf32> to vector<8xf32>
      %147 = vector.shape_cast %146 : vector<8xf32> to vector<8x1xf32>
      %cst_59 = arith.constant 3.200000e+01 : f32
      %148 = vector.broadcast %cst_59 : f32 to vector<8x1xf32>
      %149 = arith.divf %147, %148 : vector<8x1xf32>
      %150 = vector.broadcast %149 : vector<8x1xf32> to vector<8x32xf32>
      %151 = arith.subf %143, %150 : vector<8x32xf32>
      %152 = arith.mulf %151, %151 : vector<8x32xf32>
      %cst_60 = arith.constant dense<0.000000e+00> : vector<8xf32>
      %153 = vector.multi_reduction <add>, %152, %cst_60 [1] : vector<8x32xf32> to vector<8xf32>
      %154 = vector.shape_cast %153 : vector<8xf32> to vector<8x1xf32>
      %cst_61 = arith.constant 3.200000e+01 : f32
      %155 = vector.broadcast %cst_61 : f32 to vector<8x1xf32>
      %156 = arith.divf %154, %155 : vector<8x1xf32>
      %157 = vector.broadcast %149 : vector<8x1xf32> to vector<8x32xf32>
      %158 = arith.subf %143, %157 : vector<8x32xf32>
      %cst_62 = arith.constant 9.99999974E-6 : f32
      %159 = vector.broadcast %cst_62 : f32 to vector<8x1xf32>
      %160 = arith.addf %156, %159 : vector<8x1xf32>
      %161 = math.rsqrt %160 : vector<8x1xf32>
      %162 = vector.broadcast %161 : vector<8x1xf32> to vector<8x32xf32>
      %163 = arith.mulf %158, %162 : vector<8x32xf32>
      %164 = vector.broadcast %144 : vector<1x32xf32> to vector<8x32xf32>
      %165 = arith.mulf %163, %164 : vector<8x32xf32>
      %166 = vector.broadcast %145 : vector<1x32xf32> to vector<8x32xf32>
      %167 = arith.addf %165, %166 : vector<8x32xf32>
      %c0_63 = arith.constant 0 : index
      %c0_64 = arith.constant 0 : index
      %168 = vector.load %arg15[%c0_63, %c0_64] : memref<8x32xf32, #tpu.memory_space<vmem>>, vector<8x32xf32>
      tpu.vector_store %arg15[%c0_63, %c0_64], %167 {strides = array<i32>} : memref<8x32xf32, #tpu.memory_space<vmem>>, vector<8x32xf32>,
    } else {
    }
    %c0 = arith.constant 0 : index
    %c0_1 = arith.constant 0 : index
    %3 = vector.load %arg15[%c0, %c0_1] : memref<8x32xf32, #tpu.memory_space<vmem>>, vector<8x32xf32>
    %c0_2 = arith.constant 0 : index
    %c0_3 = arith.constant 0 : index
    %c0_4 = arith.constant 0 : index
    %4 = vector.load %arg5[%c0_2, %c0_3, %c0_4] : memref<1x32x32xbf16, #tpu.memory_space<vmem>>, vector<1x32x32xbf16>
    %5 = vector.shape_cast %4 : vector<1x32x32xbf16> to vector<32x32xbf16>
    %c0_5 = arith.constant 0 : index
    %c0_6 = arith.constant 0 : index
    %c0_7 = arith.constant 0 : index
    %6 = vector.load %arg6[%c0_5, %c0_6, %c0_7] : memref<1x32x32xbf16, #tpu.memory_space<vmem>>, vector<1x32x32xbf16>
    %7 = vector.shape_cast %6 : vector<1x32x32xbf16> to vector<32x32xbf16>
    %c0_8 = arith.constant 0 : index
    %c0_9 = arith.constant 0 : index
    %c0_10 = arith.constant 0 : index
    %8 = vector.load %arg7[%c0_8, %c0_9, %c0_10] : memref<1x32x32xbf16, #tpu.memory_space<vmem>>, vector<1x32x32xbf16>
    %9 = vector.shape_cast %8 : vector<1x32x32xbf16> to vector<32x32xbf16>
    %c0_11 = arith.constant 0 : index
    %c0_12 = arith.constant 0 : index
    %c0_13 = arith.constant 0 : index
    %10 = vector.load %arg8[%c0_11, %c0_12, %c0_13] : memref<1x32x32xbf16, #tpu.memory_space<vmem>>, vector<1x32x32xbf16>
    %11 = vector.shape_cast %10 : vector<1x32x32xbf16> to vector<32x32xbf16>
    %c0_14 = arith.constant 0 : index
    %c0_15 = arith.constant 0 : index
    %c0_16 = arith.constant 0 : index
    %12 = vector.load %arg9[%c0_14, %c0_15, %c0_16] : memref<1x32x64xbf16, #tpu.memory_space<vmem>>, vector<1x32x64xbf16>
    %13 = vector.shape_cast %12 : vector<1x32x64xbf16> to vector<32x64xbf16>
    %c0_17 = arith.constant 0 : index
    %c0_18 = arith.constant 0 : index
    %c0_19 = arith.constant 0 : index
    %14 = vector.load %arg10[%c0_17, %c0_18, %c0_19] : memref<1x64x32xbf16, #tpu.memory_space<vmem>>, vector<1x64x32xbf16>
    %15 = vector.shape_cast %14 : vector<1x64x32xbf16> to vector<64x32xbf16>
    %c0_20 = arith.constant 0 : index
    %c0_21 = arith.constant 0 : index
    %c0_22 = arith.constant 0 : index
    %16 = vector.load %arg11[%c0_20, %c0_21, %c0_22] : memref<1x10x64xf32, #tpu.memory_space<vmem>>, vector<1x10x64xf32>
    %17 = vector.shape_cast %16 : vector<1x10x64xf32> to vector<10x64xf32>
    %18 = vector.extract_strided_slice %17 {offsets = [0, 0], sizes = [1, 32], strides = [1, 1]} : vector<10x64xf32> to vector<1x32xf32>
    %19 = vector.extract_strided_slice %17 {offsets = [1, 0], sizes = [1, 32], strides = [1, 1]} : vector<10x64xf32> to vector<1x32xf32>
    %20 = vector.extract_strided_slice %17 {offsets = [2, 0], sizes = [1, 32], strides = [1, 1]} : vector<10x64xf32> to vector<1x32xf32>
    %21 = vector.extract_strided_slice %17 {offsets = [3, 0], sizes = [1, 32], strides = [1, 1]} : vector<10x64xf32> to vector<1x32xf32>
    %22 = vector.extract_strided_slice %17 {offsets = [4, 0], sizes = [1, 32], strides = [1, 1]} : vector<10x64xf32> to vector<1x32xf32>
    %23 = vector.extract_strided_slice %17 {offsets = [5, 0], sizes = [1, 32], strides = [1, 1]} : vector<10x64xf32> to vector<1x32xf32>
    %24 = vector.extract_strided_slice %17 {offsets = [6, 0], sizes = [1, 64], strides = [1, 1]} : vector<10x64xf32> to vector<1x64xf32>
    %25 = vector.extract_strided_slice %17 {offsets = [7, 0], sizes = [1, 32], strides = [1, 1]} : vector<10x64xf32> to vector<1x32xf32>
    %26 = vector.extract_strided_slice %17 {offsets = [8, 0], sizes = [1, 32], strides = [1, 1]} : vector<10x64xf32> to vector<1x32xf32>
    %27 = vector.extract_strided_slice %17 {offsets = [9, 0], sizes = [1, 32], strides = [1, 1]} : vector<10x64xf32> to vector<1x32xf32>
    %28 = arith.truncf %3 : vector<8x32xf32> to vector<8x32xbf16>
    %cst = arith.constant dense<0.000000e+00> : vector<8x32xf32>
    %29 = tpu.matmul %28, %5, %cst {dimension_numbers = #tpu.dot_dimension_numbers<[1], [0], [0], [1], [0, 0, 1, 1], [], []>} : vector<8x32xbf16>, vector<32x32xbf16>, vector<8x32xf32> -> vector<8x32xf32>
    %30 = vector.broadcast %18 : vector<1x32xf32> to vector<8x32xf32>
    %31 = arith.addf %29, %30 : vector<8x32xf32>
    %cst_23 = arith.constant dense<0.000000e+00> : vector<8x32xf32>
    %32 = tpu.matmul %28, %7, %cst_23 {dimension_numbers = #tpu.dot_dimension_numbers<[1], [0], [0], [1], [0, 0, 1, 1], [], []>} : vector<8x32xbf16>, vector<32x32xbf16>, vector<8x32xf32> -> vector<8x32xf32>
    %33 = vector.broadcast %19 : vector<1x32xf32> to vector<8x32xf32>
    %34 = arith.addf %32, %33 : vector<8x32xf32>
    %cst_24 = arith.constant dense<0.000000e+00> : vector<8x32xf32>
    %35 = tpu.matmul %28, %9, %cst_24 {dimension_numbers = #tpu.dot_dimension_numbers<[1], [0], [0], [1], [0, 0, 1, 1], [], []>} : vector<8x32xbf16>, vector<32x32xbf16>, vector<8x32xf32> -> vector<8x32xf32>
    %36 = vector.broadcast %20 : vector<1x32xf32> to vector<8x32xf32>
    %37 = arith.addf %35, %36 : vector<8x32xf32>
    %c0_25 = arith.constant 0 : index
    %c0_26 = arith.constant 0 : index
    %c0_27 = arith.constant 0 : index
    %38 = vector.load %arg3[%c0_25, %c0_26, %c0_27] : memref<1x1x8xf32, #tpu.memory_space<vmem>>, vector<1x1x8xf32>
    %39 = vector.shape_cast %38 : vector<1x1x8xf32> to vector<1x8xf32>
    %40 = vector.extract_strided_slice %31 {offsets = [0, 0], sizes = [8, 16], strides = [1, 1]} : vector<8x32xf32> to vector<8x16xf32>
    %41 = arith.truncf %40 : vector<8x16xf32> to vector<8x16xbf16>
    %42 = vector.extract_strided_slice %34 {offsets = [0, 0], sizes = [8, 16], strides = [1, 1]} : vector<8x32xf32> to vector<8x16xf32>
    %43 = arith.truncf %42 : vector<8x16xf32> to vector<8x16xbf16>
    %44 = vector.extract_strided_slice %37 {offsets = [0, 0], sizes = [8, 16], strides = [1, 1]} : vector<8x32xf32> to vector<8x16xf32>
    %45 = arith.truncf %44 : vector<8x16xf32> to vector<8x16xbf16>
    %cst_28 = arith.constant dense<0.000000e+00> : vector<8x8xf32>
    %46 = tpu.matmul %41, %43, %cst_28 {dimension_numbers = #tpu.dot_dimension_numbers<[1], [1], [0], [0], [0, 0, 1, 0], [], []>} : vector<8x16xbf16>, vector<8x16xbf16>, vector<8x8xf32> -> vector<8x8xf32>
    %47 = vector.broadcast %39 : vector<1x8xf32> to vector<8x8xf32>
    %48 = arith.addf %46, %47 : vector<8x8xf32>
    %49 = arith.negf %48 : vector<8x8xf32>
    %50 = math.exp %49 : vector<8x8xf32>
    %cst_29 = arith.constant 1.000000e+00 : f32
    %51 = vector.broadcast %cst_29 : f32 to vector<8x8xf32>
    %52 = arith.addf %51, %50 : vector<8x8xf32>
    %53 = arith.divf %51, %52 : vector<8x8xf32>
    %54 = arith.truncf %53 : vector<8x8xf32> to vector<8x8xbf16>
    %cst_30 = arith.constant dense<0.000000e+00> : vector<8x16xf32>
    %55 = tpu.matmul %54, %45, %cst_30 {dimension_numbers = #tpu.dot_dimension_numbers<[1], [0], [0], [1], [0, 0, 1, 1], [], []>} : vector<8x8xbf16>, vector<8x16xbf16>, vector<8x16xf32> -> vector<8x16xf32>
    %56 = vector.extract_strided_slice %31 {offsets = [0, 16], sizes = [8, 16], strides = [1, 1]} : vector<8x32xf32> to vector<8x16xf32>
    %57 = arith.truncf %56 : vector<8x16xf32> to vector<8x16xbf16>
    %58 = vector.extract_strided_slice %34 {offsets = [0, 16], sizes = [8, 16], strides = [1, 1]} : vector<8x32xf32> to vector<8x16xf32>
    %59 = arith.truncf %58 : vector<8x16xf32> to vector<8x16xbf16>
    %60 = vector.extract_strided_slice %37 {offsets = [0, 16], sizes = [8, 16], strides = [1, 1]} : vector<8x32xf32> to vector<8x16xf32>
    %61 = arith.truncf %60 : vector<8x16xf32> to vector<8x16xbf16>
    %cst_31 = arith.constant dense<0.000000e+00> : vector<8x8xf32>
    %62 = tpu.matmul %57, %59, %cst_31 {dimension_numbers = #tpu.dot_dimension_numbers<[1], [1], [0], [0], [0, 0, 1, 0], [], []>} : vector<8x16xbf16>, vector<8x16xbf16>, vector<8x8xf32> -> vector<8x8xf32>
    %63 = vector.broadcast %39 : vector<1x8xf32> to vector<8x8xf32>
    %64 = arith.addf %62, %63 : vector<8x8xf32>
    %65 = arith.negf %64 : vector<8x8xf32>
    %66 = math.exp %65 : vector<8x8xf32>
    %cst_32 = arith.constant 1.000000e+00 : f32
    %67 = vector.broadcast %cst_32 : f32 to vector<8x8xf32>
    %68 = arith.addf %67, %66 : vector<8x8xf32>
    %69 = arith.divf %67, %68 : vector<8x8xf32>
    %70 = arith.truncf %69 : vector<8x8xf32> to vector<8x8xbf16>
    %cst_33 = arith.constant dense<0.000000e+00> : vector<8x16xf32>
    %71 = tpu.matmul %70, %61, %cst_33 {dimension_numbers = #tpu.dot_dimension_numbers<[1], [0], [0], [1], [0, 0, 1, 1], [], []>} : vector<8x8xbf16>, vector<8x16xbf16>, vector<8x16xf32> -> vector<8x16xf32>
    %72 = tpu.concatenate %55, %71 in 1 : vector<8x16xf32>, vector<8x16xf32> -> vector<8x32xf32>
    %73 = arith.truncf %72 : vector<8x32xf32> to vector<8x32xbf16>
    %cst_34 = arith.constant dense<0.000000e+00> : vector<8x32xf32>
    %74 = tpu.matmul %73, %11, %cst_34 {dimension_numbers = #tpu.dot_dimension_numbers<[1], [0], [0], [1], [0, 0, 1, 1], [], []>} : vector<8x32xbf16>, vector<32x32xbf16>, vector<8x32xf32> -> vector<8x32xf32>
    %75 = vector.broadcast %21 : vector<1x32xf32> to vector<8x32xf32>
    %76 = arith.addf %74, %75 : vector<8x32xf32>
    %77 = arith.addf %76, %3 : vector<8x32xf32>
    %cst_35 = arith.constant dense<0.000000e+00> : vector<8xf32>
    %78 = vector.multi_reduction <add>, %77, %cst_35 [1] : vector<8x32xf32> to vector<8xf32>
    %79 = vector.shape_cast %78 : vector<8xf32> to vector<8x1xf32>
    %cst_36 = arith.constant 3.200000e+01 : f32
    %80 = vector.broadcast %cst_36 : f32 to vector<8x1xf32>
    %81 = arith.divf %79, %80 : vector<8x1xf32>
    %82 = vector.broadcast %81 : vector<8x1xf32> to vector<8x32xf32>
    %83 = arith.subf %77, %82 : vector<8x32xf32>
    %84 = arith.mulf %83, %83 : vector<8x32xf32>
    %cst_37 = arith.constant dense<0.000000e+00> : vector<8xf32>
    %85 = vector.multi_reduction <add>, %84, %cst_37 [1] : vector<8x32xf32> to vector<8xf32>
    %86 = vector.shape_cast %85 : vector<8xf32> to vector<8x1xf32>
    %cst_38 = arith.constant 3.200000e+01 : f32
    %87 = vector.broadcast %cst_38 : f32 to vector<8x1xf32>
    %88 = arith.divf %86, %87 : vector<8x1xf32>
    %89 = vector.broadcast %81 : vector<8x1xf32> to vector<8x32xf32>
    %90 = arith.subf %77, %89 : vector<8x32xf32>
    %cst_39 = arith.constant 9.99999974E-6 : f32
    %91 = vector.broadcast %cst_39 : f32 to vector<8x1xf32>
    %92 = arith.addf %88, %91 : vector<8x1xf32>
    %93 = math.rsqrt %92 : vector<8x1xf32>
    %94 = vector.broadcast %93 : vector<8x1xf32> to vector<8x32xf32>
    %95 = arith.mulf %90, %94 : vector<8x32xf32>
    %96 = vector.broadcast %22 : vector<1x32xf32> to vector<8x32xf32>
    %97 = arith.mulf %95, %96 : vector<8x32xf32>
    %98 = vector.broadcast %23 : vector<1x32xf32> to vector<8x32xf32>
    %99 = arith.addf %97, %98 : vector<8x32xf32>
    %100 = arith.truncf %99 : vector<8x32xf32> to vector<8x32xbf16>
    %cst_40 = arith.constant dense<0.000000e+00> : vector<8x64xf32>
    %101 = tpu.matmul %100, %13, %cst_40 {dimension_numbers = #tpu.dot_dimension_numbers<[1], [0], [0], [1], [0, 0, 1, 1], [], []>} : vector<8x32xbf16>, vector<32x64xbf16>, vector<8x64xf32> -> vector<8x64xf32>
    %102 = vector.broadcast %24 : vector<1x64xf32> to vector<8x64xf32>
    %103 = arith.addf %101, %102 : vector<8x64xf32>
    %cst_41 = arith.constant 5.000000e-01 : f32
    %104 = vector.broadcast %cst_41 : f32 to vector<8x64xf32>
    %105 = arith.mulf %104, %103 : vector<8x64xf32>
    %cst_42 = arith.constant 0.707106769 : f32
    %106 = vector.broadcast %cst_42 : f32 to vector<8x64xf32>
    %107 = arith.mulf %103, %106 : vector<8x64xf32>
    %108 = math.erf %107 : vector<8x64xf32>
    %cst_43 = arith.constant 1.000000e+00 : f32
    %109 = vector.broadcast %cst_43 : f32 to vector<8x64xf32>
    %110 = arith.addf %109, %108 : vector<8x64xf32>
    %111 = arith.mulf %105, %110 : vector<8x64xf32>
    %112 = arith.truncf %111 : vector<8x64xf32> to vector<8x64xbf16>
    %cst_44 = arith.constant dense<0.000000e+00> : vector<8x32xf32>
    %113 = tpu.matmul %112, %15, %cst_44 {dimension_numbers = #tpu.dot_dimension_numbers<[1], [0], [0], [1], [0, 0, 1, 1], [], []>} : vector<8x64xbf16>, vector<64x32xbf16>, vector<8x32xf32> -> vector<8x32xf32>
    %114 = vector.broadcast %25 : vector<1x32xf32> to vector<8x32xf32>
    %115 = arith.addf %113, %114 : vector<8x32xf32>
    %116 = arith.addf %115, %99 : vector<8x32xf32>
    %cst_45 = arith.constant dense<0.000000e+00> : vector<8xf32>
    %117 = vector.multi_reduction <add>, %116, %cst_45 [1] : vector<8x32xf32> to vector<8xf32>
    %118 = vector.shape_cast %117 : vector<8xf32> to vector<8x1xf32>
    %cst_46 = arith.constant 3.200000e+01 : f32
    %119 = vector.broadcast %cst_46 : f32 to vector<8x1xf32>
    %120 = arith.divf %118, %119 : vector<8x1xf32>
    %121 = vector.broadcast %120 : vector<8x1xf32> to vector<8x32xf32>
    %122 = arith.subf %116, %121 : vector<8x32xf32>
    %123 = arith.mulf %122, %122 : vector<8x32xf32>
    %cst_47 = arith.constant dense<0.000000e+00> : vector<8xf32>
    %124 = vector.multi_reduction <add>, %123, %cst_47 [1] : vector<8x32xf32> to vector<8xf32>
    %125 = vector.shape_cast %124 : vector<8xf32> to vector<8x1xf32>
    %cst_48 = arith.constant 3.200000e+01 : f32
    %126 = vector.broadcast %cst_48 : f32 to vector<8x1xf32>
    %127 = arith.divf %125, %126 : vector<8x1xf32>
    %128 = vector.broadcast %120 : vector<8x1xf32> to vector<8x32xf32>
    %129 = arith.subf %116, %128 : vector<8x32xf32>
    %cst_49 = arith.constant 9.99999974E-6 : f32
    %130 = vector.broadcast %cst_49 : f32 to vector<8x1xf32>
    %131 = arith.addf %127, %130 : vector<8x1xf32>
    %132 = math.rsqrt %131 : vector<8x1xf32>
    %133 = vector.broadcast %132 : vector<8x1xf32> to vector<8x32xf32>
    %134 = arith.mulf %129, %133 : vector<8x32xf32>
    %135 = vector.broadcast %26 : vector<1x32xf32> to vector<8x32xf32>
    %136 = arith.mulf %134, %135 : vector<8x32xf32>
    %137 = vector.broadcast %27 : vector<1x32xf32> to vector<8x32xf32>
    %138 = arith.addf %136, %137 : vector<8x32xf32>
    %c0_50 = arith.constant 0 : index
    %c0_51 = arith.constant 0 : index
    %139 = vector.load %arg15[%c0_50, %c0_51] : memref<8x32xf32, #tpu.memory_space<vmem>>, vector<8x32xf32>
    tpu.vector_store %arg15[%c0_50, %c0_51], %138 {strides = array<i32>} : memref<8x32xf32, #tpu.memory_space<vmem>>, vector<8x32xf32>,
    %c1_i32 = arith.constant 1 : i32
    %140 = arith.cmpi eq, %arg1, %c1_i32 : i32
    %141 = arith.extui %140 : i1 to i32
    %c0_i32_52 = arith.constant 0 : i32
    %142 = arith.cmpi ne, %141, %c0_i32_52 : i32
    scf.if %142 {
      %143 = arith.truncf %138 : vector<8x32xf32> to vector<8x32xbf16>
      %c0_53 = arith.constant 0 : index
      %c0_54 = arith.constant 0 : index
      %144 = vector.load %arg12[%c0_53, %c0_54] : memref<32x128xbf16, #tpu.memory_space<vmem>>, vector<32x128xbf16>
      %cst_55 = arith.constant dense<0.000000e+00> : vector<8x128xf32>
      %145 = tpu.matmul %143, %144, %cst_55 {dimension_numbers = #tpu.dot_dimension_numbers<[1], [0], [0], [1], [0, 0, 1, 1], [], []>} : vector<8x32xbf16>, vector<32x128xbf16>, vector<8x128xf32> -> vector<8x128xf32>
      %c0_56 = arith.constant 0 : index
      %c0_57 = arith.constant 0 : index
      %146 = vector.load %arg13[%c0_56, %c0_57] : memref<1x128xf32, #tpu.memory_space<vmem>>, vector<1x128xf32>
      %147 = vector.broadcast %146 : vector<1x128xf32> to vector<8x128xf32>
      %148 = arith.addf %145, %147 : vector<8x128xf32>
      %c0_58 = arith.constant 0 : index
      %c0_59 = arith.constant 0 : index
      %149 = vector.load %arg14[%c0_58, %c0_59] : memref<8x128xf32, #tpu.memory_space<vmem>>, vector<8x128xf32>
      tpu.vector_store %arg14[%c0_58, %c0_59], %148 {strides = array<i32>} : memref<8x128xf32, #tpu.memory_space<vmem>>, vector<8x128xf32>,
    } else {
    }
    return
  }
  func.func @transform_0(%arg0: i32, %arg1: i32) -> (i32, i32) {
    %c0_i32 = arith.constant 0 : i32
    %c0_i32_0 = arith.constant 0 : i32
    return %arg0, %c0_i32 : i32, i32
  }
  func.func @transform_1(%arg0: i32, %arg1: i32) -> (i32, i32, i32) {
    %c0_i32 = arith.constant 0 : i32
    %c0_i32_0 = arith.constant 0 : i32
    %c0_i32_1 = arith.constant 0 : i32
    return %arg0, %c0_i32, %c0_i32_0 : i32, i32, i32
  }
  func.func @transform_2(%arg0: i32, %arg1: i32) -> (i32, i32) {
    %c0_i32 = arith.constant 0 : i32
    %c0_i32_0 = arith.constant 0 : i32
    %c0_i32_1 = arith.constant 0 : i32
    return %c0_i32, %c0_i32_0 : i32, i32
  }
  func.func @transform_3(%arg0: i32, %arg1: i32) -> (i32, i32, i32) {
    %c0_i32 = arith.constant 0 : i32
    %c0_i32_0 = arith.constant 0 : i32
    %c0_i32_1 = arith.constant 0 : i32
    return %arg1, %c0_i32, %c0_i32_0 : i32, i32, i32
  }
  func.func @transform_4(%arg0: i32, %arg1: i32) -> (i32, i32, i32) {
    %c0_i32 = arith.constant 0 : i32
    %c0_i32_0 = arith.constant 0 : i32
    %c0_i32_1 = arith.constant 0 : i32
    return %arg1, %c0_i32, %c0_i32_0 : i32, i32, i32
  }
  func.func @transform_5(%arg0: i32, %arg1: i32) -> (i32, i32, i32) {
    %c0_i32 = arith.constant 0 : i32
    %c0_i32_0 = arith.constant 0 : i32
    %c0_i32_1 = arith.constant 0 : i32
    return %arg1, %c0_i32, %c0_i32_0 : i32, i32, i32
  }
  func.func @transform_6(%arg0: i32, %arg1: i32) -> (i32, i32, i32) {
    %c0_i32 = arith.constant 0 : i32
    %c0_i32_0 = arith.constant 0 : i32
    %c0_i32_1 = arith.constant 0 : i32
    return %arg1, %c0_i32, %c0_i32_0 : i32, i32, i32
  }
  func.func @transform_7(%arg0: i32, %arg1: i32) -> (i32, i32, i32) {
    %c0_i32 = arith.constant 0 : i32
    %c0_i32_0 = arith.constant 0 : i32
    %c0_i32_1 = arith.constant 0 : i32
    return %arg1, %c0_i32, %c0_i32_0 : i32, i32, i32
  }
  func.func @transform_8(%arg0: i32, %arg1: i32) -> (i32, i32, i32) {
    %c0_i32 = arith.constant 0 : i32
    %c0_i32_0 = arith.constant 0 : i32
    %c0_i32_1 = arith.constant 0 : i32
    return %arg1, %c0_i32, %c0_i32_0 : i32, i32, i32
  }
  func.func @transform_9(%arg0: i32, %arg1: i32) -> (i32, i32, i32) {
    %c0_i32 = arith.constant 0 : i32
    %c0_i32_0 = arith.constant 0 : i32
    %c0_i32_1 = arith.constant 0 : i32
    return %arg1, %c0_i32, %c0_i32_0 : i32, i32, i32
  }
  func.func @transform_10(%arg0: i32, %arg1: i32) -> (i32, i32) {
    %c0_i32 = arith.constant 0 : i32
    %c0_i32_0 = arith.constant 0 : i32
    %c0_i32_1 = arith.constant 0 : i32
    return %c0_i32, %c0_i32_0 : i32, i32
  }
  func.func @transform_11(%arg0: i32, %arg1: i32) -> (i32, i32) {
    %c0_i32 = arith.constant 0 : i32
    %c0_i32_0 = arith.constant 0 : i32
    %c0_i32_1 = arith.constant 0 : i32
    return %c0_i32, %c0_i32_0 : i32, i32
  }
  func.func @transform_12(%arg0: i32, %arg1: i32) -> (i32, i32) {
    %c0_i32 = arith.constant 0 : i32
    %c0_i32_0 = arith.constant 0 : i32
    return %arg0, %c0_i32 : i32, i32
  }
}

</mosaic_0001>

<llo_original>
// kernel: forward.1
$region0: #{forward.1}
  #allocation0 [shape = 'u32[]', space=smem, size = 0x4, offset = 0x4, fixed_abs, tag = 'smem constant byte address 0x4 - core index']
  #allocation1 [shape = 'u32[144,128]{1,0:T(1,128)}', space=vmem, size = 0x12000, scoped, tag = 'internal scratch']
  #allocation2 [shape = 'f32[8,32]{1,0:T(8,128)}', space=vmem, size = 0x1000, scoped, tag = 'scratch operand']
  %s0 = inlined_call_operand.vmem [shape: f32[16,32], index: 0, kind: input, shape index: {}]
  %s1 = inlined_call_operand.vmem [shape: f32[2,1,8], index: 1, kind: input, shape index: {}]
  %s2 = inlined_call_operand.vmem [shape: f32[2,32], index: 2, kind: input, shape index: {}]
  %s3 = inlined_call_operand.vmem [shape: bf16[2,32,32], index: 3, kind: input, shape index: {}]
  %s4 = inlined_call_operand.vmem [shape: bf16[2,32,32], index: 4, kind: input, shape index: {}]
  %s5 = inlined_call_operand.vmem [shape: bf16[2,32,32], index: 5, kind: input, shape index: {}]
  %s6 = inlined_call_operand.vmem [shape: bf16[2,32,32], index: 6, kind: input, shape index: {}]
  %s7 = inlined_call_operand.vmem [shape: bf16[2,32,64], index: 7, kind: input, shape index: {}]
  %s8 = inlined_call_operand.vmem [shape: bf16[2,64,32], index: 8, kind: input, shape index: {}]
  %s9 = inlined_call_operand.vmem [shape: f32[2,10,64], index: 9, kind: input, shape index: {}]
  %s10 = inlined_call_operand.vmem [shape: bf16[32,128], index: 10, kind: input, shape index: {}]
  %s11 = inlined_call_operand.vmem [shape: f32[1,128], index: 11, kind: input, shape index: {}]
  %s12 = inlined_call_operand.vmem [shape: f32[16,128], index: 12, kind: output, shape index: {}]
  %s13 = sld [smem:[#allocation0]]
  $region89: #{forward.1} parent=0
    _
  %s15 = ssub.s32 1, %s13
  %s16 = scalar_select 0, %s15, %s13
  loop: start=0, step=1, limit=6
  $region2: #{forward.1} parent=0 // loop_pre_header
    _
  $region3: #{forward.1} parent=0 // loop_header
    %s18 = sphi 0, %s22
    %p19 = scmp.ge.s32.totalorder %s18, 6
    %s25 = sphi 0, %s37
    %s26 = sphi 0, %s33
    %s27 = sphi 0, %s25
    %s28 = sphi 0, %s26
    %s29 = sphi 0, %s27
    %s30 = sphi 0, %s28
    %s40 = sphi 0, %s42
    %s43 = sphi 0, %s40
    %s44 = sphi 0, %s43
    %s60 = sphi 0, %s44
    %s66 = sphi 0, %s68
    %s69 = sphi 0, %s66
    %s70 = sphi 0, %s69
    %s86 = sphi 0, %s70
    %s90 = sphi 0, %s90
    %s92 = sphi 0, %s90
    %s93 = sphi 0, %s92
    %s107 = sphi 0, %s93
    %s113 = sphi 0, %s115
    %s116 = sphi 0, %s113
    %s117 = sphi 0, %s116
    %s133 = sphi 0, %s117
    %s139 = sphi 0, %s141
    %s142 = sphi 0, %s139
    %s143 = sphi 0, %s142
    %s159 = sphi 0, %s143
    %s165 = sphi 0, %s167
    %s168 = sphi 0, %s165
    %s169 = sphi 0, %s168
    %s185 = sphi 0, %s169
    %s191 = sphi 0, %s193
    %s194 = sphi 0, %s191
    %s195 = sphi 0, %s194
    %s211 = sphi 0, %s195
    %s217 = sphi 0, %s219
    %s220 = sphi 0, %s217
    %s221 = sphi 0, %s220
    %s237 = sphi 0, %s221
    %s243 = sphi 0, %s245
    %s246 = sphi 0, %s243
    %s247 = sphi 0, %s246
    %s263 = sphi 0, %s247
    %s269 = sphi 0, %s271
    %s272 = sphi 0, %s269
    %s273 = sphi 0, %s272
    %s289 = sphi 0, %s273
    %s293 = sphi 0, %s293
    %s295 = sphi 0, %s293
    %s296 = sphi 0, %s295
    %s310 = sphi 0, %s296
    %s314 = sphi 0, %s314
    %s316 = sphi 0, %s314
    %s317 = sphi 0, %s316
    %s331 = sphi 0, %s317
    %s337 = sphi 0, %s339
    %s340 = sphi 0, %s337
    %s341 = sphi 0, %s340
    %s357 = sphi 0, %s341
  $region4: #{forward.1} parent=0 // loop_header_branch
    %21 = sbr.rel (%p19) target = $region8
  $region5: #{forward.1} parent=0 // loop_body
    %s23 = ssub.s32 %s18, 1
    %s24 = ssub.s32 %s18, 2
    %s31 = sadd.s32 1, %s26
    %p32 = scmp.ge.s32.totalorder %s31, 2
    %s33 = scalar_select %p32, 0, %s31
    %s34 = sadd.s32 1, %s25
    %s35 = scalar_select %p32, %s34, %s25
    %p36 = scmp.ge.s32.totalorder %s35, 2
    %s37 = scalar_select %p36, 0, %s35
    %s38 = ssub.s32 %s25, %s37
    %p39 = scmp.eq.s32.totalorder %s38, 0
    %s41 = sadd.s32 %s40, 1
    %s42 = scalar_select %p39, %s40, %s41
    %p45 = pneg %p39
    %p46 = scmp.eq.s32.totalorder %s18, 3
    %p47 = por %p45, %p46
    %p48 = scmp.ne.s32.totalorder %s40, %s43
    %p49 = scmp.eq.s32.totalorder %s18, 0
    %p50 = por %p48, %p49
    %p51 = scmp.ne.s32.totalorder %s40, %s43
    %p52 = scmp.eq.s32.totalorder %s23, 3
    %p53 = por %p51, %p52
    %p54 = scmp.ne.s32.totalorder %s43, %s44
    %p55 = scmp.eq.s32.totalorder %s23, 0
    %p56 = por %p54, %p55
    %p57 = scmp.ne.s32.totalorder %s43, %s44
    %p58 = scmp.eq.s32.totalorder %s24, 3
    %p59 = por %p57, %p58
    %p61 = scmp.ne.s32.totalorder %s44, %s60
    %p62 = scmp.eq.s32.totalorder %s24, 0
    %p63 = por %p61, %p62
    %s64 = ssub.s32 %s25, %s37
    %p65 = scmp.eq.s32.totalorder %s64, 0
    %s67 = sadd.s32 %s66, 1
    %s68 = scalar_select %p65, %s66, %s67
    %p71 = pneg %p65
    %p72 = scmp.eq.s32.totalorder %s18, 3
    %p73 = por %p71, %p72
    %p74 = scmp.ne.s32.totalorder %s66, %s69
    %p75 = scmp.eq.s32.totalorder %s18, 0
    %p76 = por %p74, %p75
    %p77 = scmp.ne.s32.totalorder %s66, %s69
    %p78 = scmp.eq.s32.totalorder %s23, 3
    %p79 = por %p77, %p78
    %p80 = scmp.ne.s32.totalorder %s69, %s70
    %p81 = scmp.eq.s32.totalorder %s23, 0
    %p82 = por %p80, %p81
    %p83 = scmp.ne.s32.totalorder %s69, %s70
    %p84 = scmp.eq.s32.totalorder %s24, 3
    %p85 = por %p83, %p84
    %p87 = scmp.ne.s32.totalorder %s70, %s86
    %p88 = scmp.eq.s32.totalorder %s24, 0
    %p89 = por %p87, %p88
    %s91 = sadd.s32 %s90, 1
    %p94 = scmp.eq.s32.totalorder %s18, 3
    %p95 = scmp.ne.s32.totalorder %s90, %s92
    %p96 = scmp.eq.s32.totalorder %s18, 0
    %p97 = por %p95, %p96
    %p98 = scmp.ne.s32.totalorder %s90, %s92
    %p99 = scmp.eq.s32.totalorder %s23, 3
    %p100 = por %p98, %p99
    %p101 = scmp.ne.s32.totalorder %s92, %s93
    %p102 = scmp.eq.s32.totalorder %s23, 0
    %p103 = por %p101, %p102
    %p104 = scmp.ne.s32.totalorder %s92, %s93
    %p105 = scmp.eq.s32.totalorder %s24, 3
    %p106 = por %p104, %p105
    %p108 = scmp.ne.s32.totalorder %s93, %s107
    %p109 = scmp.eq.s32.totalorder %s24, 0
    %p110 = por %p108, %p109
    %s111 = ssub.s32 %s26, %s33
    %p112 = scmp.eq.s32.totalorder %s111, 0
    %s114 = sadd.s32 %s113, 1
    %s115 = scalar_select %p112, %s113, %s114
    %p118 = pneg %p112
    %p119 = scmp.eq.s32.totalorder %s18, 3
    %p120 = por %p118, %p119
    %p121 = scmp.ne.s32.totalorder %s113, %s116
    %p122 = scmp.eq.s32.totalorder %s18, 0
    %p123 = por %p121, %p122
    %p124 = scmp.ne.s32.totalorder %s113, %s116
    %p125 = scmp.eq.s32.totalorder %s23, 3
    %p126 = por %p124, %p125
    %p127 = scmp.ne.s32.totalorder %s116, %s117
    %p128 = scmp.eq.s32.totalorder %s23, 0
    %p129 = por %p127, %p128
    %p130 = scmp.ne.s32.totalorder %s116, %s117
    %p131 = scmp.eq.s32.totalorder %s24, 3
    %p132 = por %p130, %p131
    %p134 = scmp.ne.s32.totalorder %s117, %s133
    %p135 = scmp.eq.s32.totalorder %s24, 0
    %p136 = por %p134, %p135
    %s137 = ssub.s32 %s26, %s33
    %p138 = scmp.eq.s32.totalorder %s137, 0
    %s140 = sadd.s32 %s139, 1
    %s141 = scalar_select %p138, %s139, %s140
    %p144 = pneg %p138
    %p145 = scmp.eq.s32.totalorder %s18, 3
    %p146 = por %p144, %p145
    %p147 = scmp.ne.s32.totalorder %s139, %s142
    %p148 = scmp.eq.s32.totalorder %s18, 0
    %p149 = por %p147, %p148
    %p150 = scmp.ne.s32.totalorder %s139, %s142
    %p151 = scmp.eq.s32.totalorder %s23, 3
    %p152 = por %p150, %p151
    %p153 = scmp.ne.s32.totalorder %s142, %s143
    %p154 = scmp.eq.s32.totalorder %s23, 0
    %p155 = por %p153, %p154
    %p156 = scmp.ne.s32.totalorder %s142, %s143
    %p157 = scmp.eq.s32.totalorder %s24, 3
    %p158 = por %p156, %p157
    %p160 = scmp.ne.s32.totalorder %s143, %s159
    %p161 = scmp.eq.s32.totalorder %s24, 0
    %p162 = por %p160, %p161
    %s163 = ssub.s32 %s26, %s33
    %p164 = scmp.eq.s32.totalorder %s163, 0
    %s166 = sadd.s32 %s165, 1
    %s167 = scalar_select %p164, %s165, %s166
    %p170 = pneg %p164
    %p171 = scmp.eq.s32.totalorder %s18, 3
    %p172 = por %p170, %p171
    %p173 = scmp.ne.s32.totalorder %s165, %s168
    %p174 = scmp.eq.s32.totalorder %s18, 0
    %p175 = por %p173, %p174
    %p176 = scmp.ne.s32.totalorder %s165, %s168
    %p177 = scmp.eq.s32.totalorder %s23, 3
    %p178 = por %p176, %p177
    %p179 = scmp.ne.s32.totalorder %s168, %s169
    %p180 = scmp.eq.s32.totalorder %s23, 0
    %p181 = por %p179, %p180
    %p182 = scmp.ne.s32.totalorder %s168, %s169
    %p183 = scmp.eq.s32.totalorder %s24, 3
    %p184 = por %p182, %p183
    %p186 = scmp.ne.s32.totalorder %s169, %s185
    %p187 = scmp.eq.s32.totalorder %s24, 0
    %p188 = por %p186, %p187
    %s189 = ssub.s32 %s26, %s33
    %p190 = scmp.eq.s32.totalorder %s189, 0
    %s192 = sadd.s32 %s191, 1
    %s193 = scalar_select %p190, %s191, %s192
    %p196 = pneg %p190
    %p197 = scmp.eq.s32.totalorder %s18, 3
    %p198 = por %p196, %p197
    %p199 = scmp.ne.s32.totalorder %s191, %s194
    %p200 = scmp.eq.s32.totalorder %s18, 0
    %p201 = por %p199, %p200
    %p202 = scmp.ne.s32.totalorder %s191, %s194
    %p203 = scmp.eq.s32.totalorder %s23, 3
    %p204 = por %p202, %p203
    %p205 = scmp.ne.s32.totalorder %s194, %s195
    %p206 = scmp.eq.s32.totalorder %s23, 0
    %p207 = por %p205, %p206
    %p208 = scmp.ne.s32.totalorder %s194, %s195
    %p209 = scmp.eq.s32.totalorder %s24, 3
    %p210 = por %p208, %p209
    %p212 = scmp.ne.s32.totalorder %s195, %s211
    %p213 = scmp.eq.s32.totalorder %s24, 0
    %p214 = por %p212, %p213
    %s215 = ssub.s32 %s26, %s33
    %p216 = scmp.eq.s32.totalorder %s215, 0
    %s218 = sadd.s32 %s217, 1
    %s219 = scalar_select %p216, %s217, %s218
    %p222 = pneg %p216
    %p223 = scmp.eq.s32.totalorder %s18, 3
    %p224 = por %p222, %p223
    %p225 = scmp.ne.s32.totalorder %s217, %s220
    %p226 = scmp.eq.s32.totalorder %s18, 0
    %p227 = por %p225, %p226
    %p228 = scmp.ne.s32.totalorder %s217, %s220
    %p229 = scmp.eq.s32.totalorder %s23, 3
    %p230 = por %p228, %p229
    %p231 = scmp.ne.s32.totalorder %s220, %s221
    %p232 = scmp.eq.s32.totalorder %s23, 0
    %p233 = por %p231, %p232
    %p234 = scmp.ne.s32.totalorder %s220, %s221
    %p235 = scmp.eq.s32.totalorder %s24, 3
    %p236 = por %p234, %p235
    %p238 = scmp.ne.s32.totalorder %s221, %s237
    %p239 = scmp.eq.s32.totalorder %s24, 0
    %p240 = por %p238, %p239
    %s241 = ssub.s32 %s26, %s33
    %p242 = scmp.eq.s32.totalorder %s241, 0
    %s244 = sadd.s32 %s243, 1
    %s245 = scalar_select %p242, %s243, %s244
    %p248 = pneg %p242
    %p249 = scmp.eq.s32.totalorder %s18, 3
    %p250 = por %p248, %p249
    %p251 = scmp.ne.s32.totalorder %s243, %s246
    %p252 = scmp.eq.s32.totalorder %s18, 0
    %p253 = por %p251, %p252
    %p254 = scmp.ne.s32.totalorder %s243, %s246
    %p255 = scmp.eq.s32.totalorder %s23, 3
    %p256 = por %p254, %p255
    %p257 = scmp.ne.s32.totalorder %s246, %s247
    %p258 = scmp.eq.s32.totalorder %s23, 0
    %p259 = por %p257, %p258
    %p260 = scmp.ne.s32.totalorder %s246, %s247
    %p261 = scmp.eq.s32.totalorder %s24, 3
    %p262 = por %p260, %p261
    %p264 = scmp.ne.s32.totalorder %s247, %s263
    %p265 = scmp.eq.s32.totalorder %s24, 0
    %p266 = por %p264, %p265
    %s267 = ssub.s32 %s26, %s33
    %p268 = scmp.eq.s32.totalorder %s267, 0
    %s270 = sadd.s32 %s269, 1
    %s271 = scalar_select %p268, %s269, %s270
    %p274 = pneg %p268
    %p275 = scmp.eq.s32.totalorder %s18, 3
    %p276 = por %p274, %p275
    %p277 = scmp.ne.s32.totalorder %s269, %s272
    %p278 = scmp.eq.s32.totalorder %s18, 0
    %p279 = por %p277, %p278
    %p280 = scmp.ne.s32.totalorder %s269, %s272
    %p281 = scmp.eq.s32.totalorder %s23, 3
    %p282 = por %p280, %p281
    %p283 = scmp.ne.s32.totalorder %s272, %s273
    %p284 = scmp.eq.s32.totalorder %s23, 0
    %p285 = por %p283, %p284
    %p286 = scmp.ne.s32.totalorder %s272, %s273
    %p287 = scmp.eq.s32.totalorder %s24, 3
    %p288 = por %p286, %p287
    %p290 = scmp.ne.s32.totalorder %s273, %s289
    %p291 = scmp.eq.s32.totalorder %s24, 0
    %p292 = por %p290, %p291
    %s294 = sadd.s32 %s293, 1
    %p297 = scmp.eq.s32.totalorder %s18, 3
    %p298 = scmp.ne.s32.totalorder %s293, %s295
    %p299 = scmp.eq.s32.totalorder %s18, 0
    %p300 = por %p298, %p299
    %p301 = scmp.ne.s32.totalorder %s293, %s295
    %p302 = scmp.eq.s32.totalorder %s23, 3
    %p303 = por %p301, %p302
    %p304 = scmp.ne.s32.totalorder %s295, %s296
    %p305 = scmp.eq.s32.totalorder %s23, 0
    %p306 = por %p304, %p305
    %p307 = scmp.ne.s32.totalorder %s295, %s296
    %p308 = scmp.eq.s32.totalorder %s24, 3
    %p309 = por %p307, %p308
    %p311 = scmp.ne.s32.totalorder %s296, %s310
    %p312 = scmp.eq.s32.totalorder %s24, 0
    %p313 = por %p311, %p312
    %s315 = sadd.s32 %s314, 1
    %p318 = scmp.eq.s32.totalorder %s18, 3
    %p319 = scmp.ne.s32.totalorder %s314, %s316
    %p320 = scmp.eq.s32.totalorder %s18, 0
    %p321 = por %p319, %p320
    %p322 = scmp.ne.s32.totalorder %s314, %s316
    %p323 = scmp.eq.s32.totalorder %s23, 3
    %p324 = por %p322, %p323
    %p325 = scmp.ne.s32.totalorder %s316, %s317
    %p326 = scmp.eq.s32.totalorder %s23, 0
    %p327 = por %p325, %p326
    %p328 = scmp.ne.s32.totalorder %s316, %s317
    %p329 = scmp.eq.s32.totalorder %s24, 3
    %p330 = por %p328, %p329
    %p332 = scmp.ne.s32.totalorder %s317, %s331
    %p333 = scmp.eq.s32.totalorder %s24, 0
    %p334 = por %p332, %p333
    %s335 = ssub.s32 %s25, %s37
    %p336 = scmp.eq.s32.totalorder %s335, 0
    %s338 = sadd.s32 %s337, 1
    %s339 = scalar_select %p336, %s337, %s338
    %p342 = pneg %p336
    %p343 = scmp.eq.s32.totalorder %s18, 3
    %p344 = por %p342, %p343
    %p345 = scmp.ne.s32.totalorder %s337, %s340
    %p346 = scmp.eq.s32.totalorder %s18, 0
    %p347 = por %p345, %p346
    %p348 = scmp.ne.s32.totalorder %s337, %s340
    %p349 = scmp.eq.s32.totalorder %s23, 3
    %p350 = por %p348, %p349
    %p351 = scmp.ne.s32.totalorder %s340, %s341
    %p352 = scmp.eq.s32.totalorder %s23, 0
    %p353 = por %p351, %p352
    %p354 = scmp.ne.s32.totalorder %s340, %s341
    %p355 = scmp.eq.s32.totalorder %s24, 3
    %p356 = por %p354, %p355
    %p358 = scmp.ne.s32.totalorder %s341, %s357
    %p359 = scmp.eq.s32.totalorder %s24, 0
    %p360 = por %p358, %p359
    %p361 = scmp.le.s32.totalorder 1, %s18
    %p362 = scmp.lt.s32.totalorder %s18, 5
    %p363 = pnand %p361, %p362
    %p364 = pneg %p363
    // Predicated region
    $region9: #{forward.1} parent=5 // pred_check
      _
    $region10: #{forward.1} parent=5 // pred_check_branch
      %366 = sbr.rel (%p363) target = $region12
    $region11: #{forward.1} parent=5 // pred_region
      %s367 = ssub.s32 %s18, 1
      // Predicated region
      $region13: #{forward.1} parent=11 // pred_check
        %p368 = pneg %p103
      $region14: #{forward.1} parent=11 // pred_check_branch
        %370 = sbr.rel (%p368) target = $region16
      $region15: #{forward.1} parent=11 // pred_region
        _
      $region16: #{forward.1} parent=11 // pred_fallthru
        _
      // Predicated region
      $region17: #{forward.1} parent=11 // pred_check
        %p371 = pneg %p306
      $region18: #{forward.1} parent=11 // pred_check_branch
        %373 = sbr.rel (%p371) target = $region20
      $region19: #{forward.1} parent=11 // pred_region
        _
      $region20: #{forward.1} parent=11 // pred_fallthru
        _
      // Predicated region
      $region21: #{forward.1} parent=11 // pred_check
        %p374 = pneg %p327
      $region22: #{forward.1} parent=11 // pred_check_branch
        %376 = sbr.rel (%p374) target = $region24
      $region23: #{forward.1} parent=11 // pred_region
        _
      $region24: #{forward.1} parent=11 // pred_fallthru
        _
    $region12: #{forward.1} parent=5 // pred_fallthru
      _
    %p377 = scmp.lt.s32.totalorder %s18, 4
    // Predicated region
    $region25: #{forward.1} parent=5 // pred_check
      %p378 = pneg %p377
    $region26: #{forward.1} parent=5 // pred_check_branch
      %380 = sbr.rel (%p378) target = $region28
    $region27: #{forward.1} parent=5 // pred_region
      // Predicated region
      $region29: #{forward.1} parent=27 // pred_check
        %p381 = pneg %p50
      $region30: #{forward.1} parent=27 // pred_check_branch
        %383 = sbr.rel (%p381) target = $region32
      $region31: #{forward.1} parent=27 // pred_region
        %p384 = scmp.lt.s32.totalorder %s25, 1
        %s385 = scalar_select %p384, %s25, 1
        %s386 = smul.addr %s385, 8
        %s387 = scalar_lea.vmem %s0, %s386
      $region32: #{forward.1} parent=27 // pred_fallthru
        _
      // Predicated region
      $region33: #{forward.1} parent=27 // pred_check
        %p388 = pneg %p76
      $region34: #{forward.1} parent=27 // pred_check_branch
        %390 = sbr.rel (%p388) target = $region36
      $region35: #{forward.1} parent=27 // pred_region
        %p391 = scmp.lt.s32.totalorder %s25, 1
        %s392 = scalar_select %p391, %s25, 1
        %s393 = scalar_lea.vmem %s1, %s392
      $region36: #{forward.1} parent=27 // pred_fallthru
        _
      // Predicated region
      $region37: #{forward.1} parent=27 // pred_check
        %p394 = pneg %p123
      $region38: #{forward.1} parent=27 // pred_check_branch
        %396 = sbr.rel (%p394) target = $region40
      $region39: #{forward.1} parent=27 // pred_region
        %p397 = scmp.lt.s32.totalorder %s26, 1
        %s398 = scalar_select %p397, %s26, 1
        %s399 = smul.addr %s398, 4
        %s400 = smul.addr %s399, 4
        %s401 = scalar_lea.vmem %s3, %s400
      $region40: #{forward.1} parent=27 // pred_fallthru
        _
      // Predicated region
      $region41: #{forward.1} parent=27 // pred_check
        %p402 = pneg %p149
      $region42: #{forward.1} parent=27 // pred_check_branch
        %404 = sbr.rel (%p402) target = $region44
      $region43: #{forward.1} parent=27 // pred_region
        %p405 = scmp.lt.s32.totalorder %s26, 1
        %s406 = scalar_select %p405, %s26, 1
        %s407 = smul.addr %s406, 4
        %s408 = smul.addr %s407, 4
        %s409 = scalar_lea.vmem %s4, %s408
      $region44: #{forward.1} parent=27 // pred_fallthru
        _
      // Predicated region
      $region45: #{forward.1} parent=27 // pred_check
        %p410 = pneg %p175
      $region46: #{forward.1} parent=27 // pred_check_branch
        %412 = sbr.rel (%p410) target = $region48
      $region47: #{forward.1} parent=27 // pred_region
        %p413 = scmp.lt.s32.totalorder %s26, 1
        %s414 = scalar_select %p413, %s26, 1
        %s415 = smul.addr %s414, 4
        %s416 = smul.addr %s415, 4
        %s417 = scalar_lea.vmem %s5, %s416
      $region48: #{forward.1} parent=27 // pred_fallthru
        _
      // Predicated region
      $region49: #{forward.1} parent=27 // pred_check
        %p418 = pneg %p201
      $region50: #{forward.1} parent=27 // pred_check_branch
        %420 = sbr.rel (%p418) target = $region52
      $region51: #{forward.1} parent=27 // pred_region
        %p421 = scmp.lt.s32.totalorder %s26, 1
        %s422 = scalar_select %p421, %s26, 1
        %s423 = smul.addr %s422, 4
        %s424 = smul.addr %s423, 4
        %s425 = scalar_lea.vmem %s6, %s424
      $region52: #{forward.1} parent=27 // pred_fallthru
        _
      // Predicated region
      $region53: #{forward.1} parent=27 // pred_check
        %p426 = pneg %p227
      $region54: #{forward.1} parent=27 // pred_check_branch
        %428 = sbr.rel (%p426) target = $region56
      $region55: #{forward.1} parent=27 // pred_region
        %p429 = scmp.lt.s32.totalorder %s26, 1
        %s430 = scalar_select %p429, %s26, 1
        %s431 = smul.addr %s430, 4
        %s432 = smul.addr %s431, 4
        %s433 = scalar_lea.vmem %s7, %s432
      $region56: #{forward.1} parent=27 // pred_fallthru
        _
      // Predicated region
      $region57: #{forward.1} parent=27 // pred_check
        %p434 = pneg %p253
      $region58: #{forward.1} parent=27 // pred_check_branch
        %436 = sbr.rel (%p434) target = $region60
      $region59: #{forward.1} parent=27 // pred_region
        %p437 = scmp.lt.s32.totalorder %s26, 1
        %s438 = scalar_select %p437, %s26, 1
        %s439 = smul.addr %s438, 8
        %s440 = smul.addr %s439, 4
        %s441 = scalar_lea.vmem %s8, %s440
      $region60: #{forward.1} parent=27 // pred_fallthru
        _
      // Predicated region
      $region61: #{forward.1} parent=27 // pred_check
        %p442 = pneg %p279
      $region62: #{forward.1} parent=27 // pred_check_branch
        %444 = sbr.rel (%p442) target = $region64
      $region63: #{forward.1} parent=27 // pred_region
        %p445 = scmp.lt.s32.totalorder %s26, 1
        %s446 = scalar_select %p445, %s26, 1
        %s447 = smul.addr %s446, 2
        %s448 = smul.addr %s447, 8
        %s449 = scalar_lea.vmem %s9, %s448
      $region64: #{forward.1} parent=27 // pred_fallthru
        _
    $region28: #{forward.1} parent=5 // pred_fallthru
      _
    %p450 = scmp.le.s32.totalorder 1, %s18
    %p451 = scmp.lt.s32.totalorder %s18, 5
    %p452 = pnand %p450, %p451
    %p453 = pneg %p452
    // Predicated region
    $region65: #{forward.1} parent=5 // pred_check
      _
    $region66: #{forward.1} parent=5 // pred_check_branch
      %455 = sbr.rel (%p452) target = $region68
    $region67: #{forward.1} parent=5 // pred_region
      %s456 = ssub.s32 %s18, 1
      %p457 = scmp.lt.s32.totalorder %s27, 1
      %s458 = scalar_select %p457, %s27, 1
      %s459 = smul.addr %s458, 8
      %s460 = scalar_lea.vmem %s0, %s459
      %p461 = pneg %p56
      %p462 = pneg %p53
      %p463 = scmp.lt.s32.totalorder %s27, 1
      %s464 = scalar_select %p463, %s27, 1
      %s465 = scalar_lea.vmem %s1, %s464
      %p466 = pneg %p82
      %p467 = pneg %p79
      %p468 = pneg %p103
      %p469 = pneg %p100
      %p470 = scmp.lt.s32.totalorder %s28, 1
      %s471 = scalar_select %p470, %s28, 1
      %s472 = smul.addr %s471, 4
      %s473 = smul.addr %s472, 4
      %s474 = scalar_lea.vmem %s3, %s473
      %p475 = pneg %p129
      %p476 = pneg %p126
      %p477 = scmp.lt.s32.totalorder %s28, 1
      %s478 = scalar_select %p477, %s28, 1
      %s479 = smul.addr %s478, 4
      %s480 = smul.addr %s479, 4
      %s481 = scalar_lea.vmem %s4, %s480
      %p482 = pneg %p155
      %p483 = pneg %p152
      %p484 = scmp.lt.s32.totalorder %s28, 1
      %s485 = scalar_select %p484, %s28, 1
      %s486 = smul.addr %s485, 4
      %s487 = smul.addr %s486, 4
      %s488 = scalar_lea.vmem %s5, %s487
      %p489 = pneg %p181
      %p490 = pneg %p178
      %p491 = scmp.lt.s32.totalorder %s28, 1
      %s492 = scalar_select %p491, %s28, 1
      %s493 = smul.addr %s492, 4
      %s494 = smul.addr %s493, 4
      %s495 = scalar_lea.vmem %s6, %s494
      %p496 = pneg %p207
      %p497 = pneg %p204
      %p498 = scmp.lt.s32.totalorder %s28, 1
      %s499 = scalar_select %p498, %s28, 1
      %s500 = smul.addr %s499, 4
      %s501 = smul.addr %s500, 4
      %s502 = scalar_lea.vmem %s7, %s501
      %p503 = pneg %p233
      %p504 = pneg %p230
      %p505 = scmp.lt.s32.totalorder %s28, 1
      %s506 = scalar_select %p505, %s28, 1
      %s507 = smul.addr %s506, 8
      %s508 = smul.addr %s507, 4
      %s509 = scalar_lea.vmem %s8, %s508
      %p510 = pneg %p259
      %p511 = pneg %p256
      %p512 = scmp.lt.s32.totalorder %s28, 1
      %s513 = scalar_select %p512, %s28, 1
      %s514 = smul.addr %s513, 2
      %s515 = smul.addr %s514, 8
      %s516 = scalar_lea.vmem %s9, %s515
      %p517 = pneg %p285
      %p518 = pneg %p282
      %p519 = pneg %p306
      %p520 = pneg %p303
      %p521 = pneg %p327
      %p522 = pneg %p324
      %p523 = pneg %p353
      %p524 = pneg %p350
      %p525 = scmp.lt.s32.totalorder %s27, 1
      %s526 = scalar_select %p525, %s27, 1
      %s527 = smul.addr %s526, 8
      %s528 = scalar_lea.vmem %s12, %s527
      %p529 = scmp.lt.s32.totalorder %s27, 1
      %s530 = scalar_select %p529, %s27, 1
      %s531 = smul.addr %s530, 8
      %s532 = scalar_lea.vmem %s0, %s531
      %p533 = scmp.lt.s32.totalorder %s27, 1
      %s534 = scalar_select %p533, %s27, 1
      %s535 = scalar_lea.vmem %s1, %s534
      %p536 = scmp.lt.s32.totalorder %s28, 1
      %s537 = scalar_select %p536, %s28, 1
      %s538 = smul.addr %s537, 4
      %s539 = smul.addr %s538, 4
      %s540 = scalar_lea.vmem %s3, %s539
      %p541 = scmp.lt.s32.totalorder %s28, 1
      %s542 = scalar_select %p541, %s28, 1
      %s543 = smul.addr %s542, 4
      %s544 = smul.addr %s543, 4
      %s545 = scalar_lea.vmem %s4, %s544
      %p546 = scmp.lt.s32.totalorder %s28, 1
      %s547 = scalar_select %p546, %s28, 1
      %s548 = smul.addr %s547, 4
      %s549 = smul.addr %s548, 4
      %s550 = scalar_lea.vmem %s5, %s549
      %p551 = scmp.lt.s32.totalorder %s28, 1
      %s552 = scalar_select %p551, %s28, 1
      %s553 = smul.addr %s552, 4
      %s554 = smul.addr %s553, 4
      %s555 = scalar_lea.vmem %s6, %s554
      %p556 = scmp.lt.s32.totalorder %s28, 1
      %s557 = scalar_select %p556, %s28, 1
      %s558 = smul.addr %s557, 4
      %s559 = smul.addr %s558, 4
      %s560 = scalar_lea.vmem %s7, %s559
      %p561 = scmp.lt.s32.totalorder %s28, 1
      %s562 = scalar_select %p561, %s28, 1
      %s563 = smul.addr %s562, 8
      %s564 = smul.addr %s563, 4
      %s565 = scalar_lea.vmem %s8, %s564
      %p566 = scmp.lt.s32.totalorder %s28, 1
      %s567 = scalar_select %p566, %s28, 1
      %s568 = smul.addr %s567, 2
      %s569 = smul.addr %s568, 8
      %s570 = scalar_lea.vmem %s9, %s569
      %p571 = scmp.lt.s32.totalorder %s27, 1
      %s572 = scalar_select %p571, %s27, 1
      %s573 = smul.addr %s572, 8
      %s574 = scalar_lea.vmem %s12, %s573
      %p576 = scmp.eq.s32.totalorder %s28, 0
      // Predicated region
      $region69: #{forward.1} parent=67 // pred_check
        %p577 = pneg %p576
      $region70: #{forward.1} parent=67 // pred_check_branch
        %579 = sbr.rel (%p577) target = $region72
      $region71: #{forward.1} parent=67 // pred_region
        %v580 = vld [vmem:[%s532] sm:$0xff]
        %v581 = vld [vmem:[%s2] sm:$0x1]
        %v582 = vld [vmem:[%s2 + $0x1] sm:$0x1]
        %vm583 = vcmask 261120
        %v584 = vsel %vm583, %v580, 0.0
        %585 = vadd.xlane.f32.xlu0 %v584
        %v586 = vpop.xlane.xlu0 %585
        %v587 = vrcp.pop 32.0
        %v588 = vmul.f32 %v586, %v587
        %v589 = vsub.f32 %v580, %v588
        %v590 = vmul.f32 %v589, %v589
        %v591 = vsel %vm583, %v590, 0.0
        %592 = vadd.xlane.f32.xlu0 %v591
        %v593 = vpop.xlane.xlu0 %592
        %v594 = vmul.f32 %v593, %v587
        %v595 = vadd.f32 %v594, 1e-05
        %v596 = vrsqrt.pop %v595
        %v597 = vmul.f32 %v589, %v596
        %v598 = vlaneseq
        %v599 = vshrl.u32 %v598, 7
        %v600 = vsub.s32 0, %v599
        %v601 = vrot.slane %v581, %v600
        %v602 = vmul.f32 %v597, %v601
        %v603 = vlaneseq
        %v604 = vshrl.u32 %v603, 7
        %v605 = vsub.s32 0, %v604
        %v606 = vrot.slane %v582, %v605
        %v607 = vadd.f32 %v602, %v606
        %608 = vst.msk [vmem:[#allocation2] sm:$0xff] %vm583, %v607
      $region72: #{forward.1} parent=67 // pred_fallthru
        _
      %v609 = vld [vmem:[#allocation2] sm:$0xff]
      %v610 = vld [vmem:[%s540] sm:$0xf]
      %v611 = vld [vmem:[%s540 + $0x4] sm:$0xf]
      %v612 = vld [vmem:[%s540 + $0x8] sm:$0xf]
      %v613 = vld [vmem:[%s540 + $0xc] sm:$0xf]
      %v614 = vld [vmem:[%s545] sm:$0xf]
      %v615 = vld [vmem:[%s545 + $0x4] sm:$0xf]
      %v616 = vld [vmem:[%s545 + $0x8] sm:$0xf]
      %v617 = vld [vmem:[%s545 + $0xc] sm:$0xf]
      %v618 = vld [vmem:[%s550] sm:$0xf]
      %v619 = vld [vmem:[%s550 + $0x4] sm:$0xf]
      %v620 = vld [vmem:[%s550 + $0x8] sm:$0xf]
      %v621 = vld [vmem:[%s550 + $0xc] sm:$0xf]
      %v622 = vld [vmem:[%s555] sm:$0xf]
      %v623 = vld [vmem:[%s555 + $0x4] sm:$0xf]
      %v624 = vld [vmem:[%s555 + $0x8] sm:$0xf]
      %v625 = vld [vmem:[%s555 + $0xc] sm:$0xf]
      %v626 = vld [vmem:[%s560] sm:$0xf]
      %v627 = vld [vmem:[%s560 + $0x4] sm:$0xf]
      %v628 = vld [vmem:[%s560 + $0x8] sm:$0xf]
      %v629 = vld [vmem:[%s560 + $0xc] sm:$0xf]
      %v630 = vld [vmem:[%s565] sm:$0xf]
      %v631 = vld [vmem:[%s565 + $0x4] sm:$0xf]
      %v632 = vld [vmem:[%s565 + $0x8] sm:$0xf]
      %v633 = vld [vmem:[%s565 + $0xc] sm:$0xf]
      %v634 = vld [vmem:[%s565 + $0x10] sm:$0xf]
      %v635 = vld [vmem:[%s565 + $0x14] sm:$0xf]
      %v636 = vld [vmem:[%s565 + $0x18] sm:$0xf]
      %v637 = vld [vmem:[%s565 + $0x1c] sm:$0xf]
      %v638 = vld [vmem:[%s570] sm:$0xff]
      %v639 = vld [vmem:[%s570 + $0x8] sm:$0x3]
      %v640 = vpack.c.bf16 %v609, %v609
      %v641 = vlaneseq
      %v642 = vshrl.u32 %v641, 7
      %v643 = vsub.s32 0, %v642
      %v644 = vrot.slane %v638, %v643
      %v649 = vunpack.c.l.b16 %v610
      %v650 = vunpack.c.l.b16 %v611
      %v651 = vunpack.c.l.b16 %v612
      %v652 = vunpack.c.l.b16 %v613
      %v653 = vpack.c.b16 %v650, %v649
      %v654 = vpack.c.b16 %v652, %v651
      %vm657 = vcmask 261120
      %v659 = vsel %vm657, %v640, 0
      %661 = vmatprep.subr.bf16.mxu0 0
      %662 = vmatpush1.bf16.msra.mxu0 %v653
      %663 = vmatprep.subr.bf16.mxu0 0
      %664 = vmatpush1.bf16.msra.mxu0 %v654
      %665 = vmatprep.subr.bf16.mxu0 0
      %666 = vmatpush1.bf16.msra.mxu0 0
      %667 = vmatprep.subr.bf16.mxu0 0
      %668 = vmatpush1.bf16.msra.mxu0 0
      %669 = vmatprep.subr.bf16.mxu0 0
      %670 = vmatpush1.bf16.msra.mxu0 0
      %671 = vmatprep.subr.bf16.mxu0 0
      %672 = vmatpush1.bf16.msra.mxu0 0
      %673 = vmatprep.subr.bf16.mxu0 0
      %674 = vmatpush1.bf16.msra.mxu0 0
      %675 = vmatprep.subr.bf16.mxu0 0
      %676 = vmatpush1.bf16.msra.mxu0 0
      %677 = vmatprep.subr.bf16.mxu0 0
      %678 = vmatpush1.bf16.msra.mxu0 0
      %679 = vmatprep.subr.bf16.mxu0 0
      %680 = vmatpush1.bf16.msra.mxu0 0
      %681 = vmatprep.subr.bf16.mxu0 0
      %682 = vmatpush1.bf16.msra.mxu0 0
      %683 = vmatprep.subr.bf16.mxu0 0
      %684 = vmatpush1.bf16.msra.mxu0 0
      %685 = vmatprep.subr.bf16.mxu0 0
      %686 = vmatpush1.bf16.msra.mxu0 0
      %687 = vmatprep.subr.bf16.mxu0 0
      %688 = vmatpush1.bf16.msra.mxu0 0
      %689 = vmatprep.subr.bf16.mxu0 0
      %690 = vmatpush1.bf16.msra.mxu0 0
      %691 = vmatprep.subr.bf16.mxu0 0
      %692 = vmatpush1.bf16.msra.mxu0 0
      %693 = vmatprep.mubr.bf16.mxu0 0
      %694 = vmatmul.mubr.bf16.gmra.mrb[0].mxu0 %v659
      %v695 = vpop.f32.mrb[0].mxu0
      %v696 = vadd.f32 %v644, %v695
      %v697 = vpop.f32.mrb[0].mxu0
      %v698 = vpop.f32.mrb[0].mxu0
      %v699 = vpop.f32.mrb[0].mxu0
      %700 = vdwg.mxu0
      %v701 = vlaneseq
      %v702 = vshrl.u32 %v701, 7
      %v703 = vsub.s32 1, %v702
      %v704 = vrot.slane %v638, %v703
      %v709 = vunpack.c.l.b16 %v614
      %v710 = vunpack.c.l.b16 %v615
      %v711 = vunpack.c.l.b16 %v616
      %v712 = vunpack.c.l.b16 %v617
      %v713 = vpack.c.b16 %v710, %v709
      %v714 = vpack.c.b16 %v712, %v711
      %717 = vmatprep.subr.bf16.mxu0 0
      %718 = vmatpush1.bf16.msra.mxu0 %v713
      %719 = vmatprep.subr.bf16.mxu0 0
      %720 = vmatpush1.bf16.msra.mxu0 %v714
      %721 = vmatprep.subr.bf16.mxu0 0
      %722 = vmatpush1.bf16.msra.mxu0 0
      %723 = vmatprep.subr.bf16.mxu0 0
      %724 = vmatpush1.bf16.msra.mxu0 0
      %725 = vmatprep.subr.bf16.mxu0 0
      %726 = vmatpush1.bf16.msra.mxu0 0
      %727 = vmatprep.subr.bf16.mxu0 0
      %728 = vmatpush1.bf16.msra.mxu0 0
      %729 = vmatprep.subr.bf16.mxu0 0
      %730 = vmatpush1.bf16.msra.mxu0 0
      %731 = vmatprep.subr.bf16.mxu0 0
      %732 = vmatpush1.bf16.msra.mxu0 0
      %733 = vmatprep.subr.bf16.mxu0 0
      %734 = vmatpush1.bf16.msra.mxu0 0
      %735 = vmatprep.subr.bf16.mxu0 0
      %736 = vmatpush1.bf16.msra.mxu0 0
      %737 = vmatprep.subr.bf16.mxu0 0
      %738 = vmatpush1.bf16.msra.mxu0 0
      %739 = vmatprep.subr.bf16.mxu0 0
      %740 = vmatpush1.bf16.msra.mxu0 0
      %741 = vmatprep.subr.bf16.mxu0 0
      %742 = vmatpush1.bf16.msra.mxu0 0
      %743 = vmatprep.subr.bf16.mxu0 0
      %744 = vmatpush1.bf16.msra.mxu0 0
      %745 = vmatprep.subr.bf16.mxu0 0
      %746 = vmatpush1.bf16.msra.mxu0 0
      %747 = vmatprep.subr.bf16.mxu0 0
      %748 = vmatpush1.bf16.msra.mxu0 0
      %749 = vmatprep.mubr.bf16.mxu0 0
      %750 = vmatmul.mubr.bf16.gmra.mrb[0].mxu0 %v659
      %v751 = vpop.f32.mrb[0].mxu0
      %v752 = vadd.f32 %v704, %v751
      %v753 = vpop.f32.mrb[0].mxu0
      %v754 = vpop.f32.mrb[0].mxu0
      %v755 = vpop.f32.mrb[0].mxu0
      %756 = vdwg.mxu0
      %v757 = vlaneseq
      %v758 = vshrl.u32 %v757, 7
      %v759 = vsub.s32 2, %v758
      %v760 = vrot.slane %v638, %v759
      %v765 = vunpack.c.l.b16 %v618
      %v766 = vunpack.c.l.b16 %v619
      %v767 = vunpack.c.l.b16 %v620
      %v768 = vunpack.c.l.b16 %v621
      %v769 = vpack.c.b16 %v766, %v765
      %v770 = vpack.c.b16 %v768, %v767
      %773 = vmatprep.subr.bf16.mxu0 0
      %774 = vmatpush1.bf16.msra.mxu0 %v769
      %775 = vmatprep.subr.bf16.mxu0 0
      %776 = vmatpush1.bf16.msra.mxu0 %v770
      %777 = vmatprep.subr.bf16.mxu0 0
      %778 = vmatpush1.bf16.msra.mxu0 0
      %779 = vmatprep.subr.bf16.mxu0 0
      %780 = vmatpush1.bf16.msra.mxu0 0
      %781 = vmatprep.subr.bf16.mxu0 0
      %782 = vmatpush1.bf16.msra.mxu0 0
      %783 = vmatprep.subr.bf16.mxu0 0
      %784 = vmatpush1.bf16.msra.mxu0 0
      %785 = vmatprep.subr.bf16.mxu0 0
      %786 = vmatpush1.bf16.msra.mxu0 0
      %787 = vmatprep.subr.bf16.mxu0 0
      %788 = vmatpush1.bf16.msra.mxu0 0
      %789 = vmatprep.subr.bf16.mxu0 0
      %790 = vmatpush1.bf16.msra.mxu0 0
      %791 = vmatprep.subr.bf16.mxu0 0
      %792 = vmatpush1.bf16.msra.mxu0 0
      %793 = vmatprep.subr.bf16.mxu0 0
      %794 = vmatpush1.bf16.msra.mxu0 0
      %795 = vmatprep.subr.bf16.mxu0 0
      %796 = vmatpush1.bf16.msra.mxu0 0
      %797 = vmatprep.subr.bf16.mxu0 0
      %798 = vmatpush1.bf16.msra.mxu0 0
      %799 = vmatprep.subr.bf16.mxu0 0
      %800 = vmatpush1.bf16.msra.mxu0 0
      %801 = vmatprep.subr.bf16.mxu0 0
      %802 = vmatpush1.bf16.msra.mxu0 0
      %803 = vmatprep.subr.bf16.mxu0 0
      %804 = vmatpush1.bf16.msra.mxu0 0
      %805 = vmatprep.mubr.bf16.mxu0 0
      %806 = vmatmul.mubr.bf16.gmra.mrb[0].mxu0 %v659
      %v807 = vpop.f32.mrb[0].mxu0
      %v808 = vadd.f32 %v760, %v807
      %v809 = vpop.f32.mrb[0].mxu0
      %v810 = vpop.f32.mrb[0].mxu0
      %v811 = vpop.f32.mrb[0].mxu0
      %812 = vdwg.mxu0
      %v813 = vld [vmem:[%s535] sm:$0x1]
      %v814 = vpack.c.bf16 %v696, %v696
      %v815 = vpack.c.bf16 %v752, %v752
      %v816 = vpack.c.bf16 %v808, %v808
      %v818 = vlaneseq
      %v819 = vshrl.u32 %v818, 7
      %v820 = vsub.s32 0, %v819
      %v821 = vrot.slane %v813, %v820
      %vm823 = vcmask 130048
      %v825 = vsel %vm823, %v814, 0
      %v828 = vsel %vm823, %v815, 0
      %830 = vmatprep.subr.bf16.mxu0 0
      %831 = vmatpush1.bf16.xpose.msra.mxu0 %v828
      %832 = vmatprep.subr.bf16.mxu0 0
      %833 = vmatpush1.bf16.xpose.msra.mxu0 0
      %834 = vmatprep.subr.bf16.mxu0 0
      %835 = vmatpush1.bf16.xpose.msra.mxu0 0
      %836 = vmatprep.subr.bf16.mxu0 0
      %837 = vmatpush1.bf16.xpose.msra.mxu0 0
      %838 = vmatprep.subr.bf16.mxu0 0
      %839 = vmatpush1.bf16.xpose.msra.mxu0 0
      %840 = vmatprep.subr.bf16.mxu0 0
      %841 = vmatpush1.bf16.xpose.msra.mxu0 0
      %842 = vmatprep.subr.bf16.mxu0 0
      %843 = vmatpush1.bf16.xpose.msra.mxu0 0
      %844 = vmatprep.subr.bf16.mxu0 0
      %845 = vmatpush1.bf16.xpose.msra.mxu0 0
      %846 = vmatprep.subr.bf16.mxu0 0
      %847 = vmatpush1.bf16.xpose.msra.mxu0 0
      %848 = vmatprep.subr.bf16.mxu0 0
      %849 = vmatpush1.bf16.xpose.msra.mxu0 0
      %850 = vmatprep.subr.bf16.mxu0 0
      %851 = vmatpush1.bf16.xpose.msra.mxu0 0
      %852 = vmatprep.subr.bf16.mxu0 0
      %853 = vmatpush1.bf16.xpose.msra.mxu0 0
      %854 = vmatprep.subr.bf16.mxu0 0
      %855 = vmatpush1.bf16.xpose.msra.mxu0 0
      %856 = vmatprep.subr.bf16.mxu0 0
      %857 = vmatpush1.bf16.xpose.msra.mxu0 0
      %858 = vmatprep.subr.bf16.mxu0 0
      %859 = vmatpush1.bf16.xpose.msra.mxu0 0
      %860 = vmatprep.subr.bf16.mxu0 0
      %861 = vmatpush1.bf16.xpose.msra.mxu0 0
      %862 = vmatprep.mubr.bf16.mxu0 0
      %863 = vmatmul.mubr.bf16.gmra.mrb[0].mxu0 %v825
      %v864 = vpop.f32.mrb[0].mxu0
      %v865 = vadd.f32 %v821, %v864
      %v866 = vpop.f32.mrb[0].mxu0
      %v867 = vpop.f32.mrb[0].mxu0
      %v868 = vpop.f32.mrb[0].mxu0
      %869 = vdwg.mxu0
      %v870 = vxor.u32 %v865, 2147483648
      %v871 = vmul.f32 %v870, 1.442695
      %v872 = vpow.pop %v871
      %v873 = vadd.f32 %v872, 1.0
      %v874 = vrcp.pop %v873
      %v875 = vmul.f32 1.0, %v874
      %v876 = vpack.c.bf16 %v875, %v875
      %vm877 = vcmask 64512
      %v879 = vsel %vm877, %v876, 0
      %vm881 = vcmask 1043456
      %v883 = vsel %vm881, %v816, 0
      %885 = vmatprep.subr.bf16.mxu0 0
      %886 = vmatpush1.bf16.msra.mxu0 %v883
      %887 = vmatprep.subr.bf16.mxu0 0
      %888 = vmatpush1.bf16.msra.mxu0 0
      %889 = vmatprep.subr.bf16.mxu0 0
      %890 = vmatpush1.bf16.msra.mxu0 0
      %891 = vmatprep.subr.bf16.mxu0 0
      %892 = vmatpush1.bf16.msra.mxu0 0
      %893 = vmatprep.subr.bf16.mxu0 0
      %894 = vmatpush1.bf16.msra.mxu0 0
      %895 = vmatprep.subr.bf16.mxu0 0
      %896 = vmatpush1.bf16.msra.mxu0 0
      %897 = vmatprep.subr.bf16.mxu0 0
      %898 = vmatpush1.bf16.msra.mxu0 0
      %899 = vmatprep.subr.bf16.mxu0 0
      %900 = vmatpush1.bf16.msra.mxu0 0
      %901 = vmatprep.subr.bf16.mxu0 0
      %902 = vmatpush1.bf16.msra.mxu0 0
      %903 = vmatprep.subr.bf16.mxu0 0
      %904 = vmatpush1.bf16.msra.mxu0 0
      %905 = vmatprep.subr.bf16.mxu0 0
      %906 = vmatpush1.bf16.msra.mxu0 0
      %907 = vmatprep.subr.bf16.mxu0 0
      %908 = vmatpush1.bf16.msra.mxu0 0
      %909 = vmatprep.subr.bf16.mxu0 0
      %910 = vmatpush1.bf16.msra.mxu0 0
      %911 = vmatprep.subr.bf16.mxu0 0
      %912 = vmatpush1.bf16.msra.mxu0 0
      %913 = vmatprep.subr.bf16.mxu0 0
      %914 = vmatpush1.bf16.msra.mxu0 0
      %915 = vmatprep.subr.bf16.mxu0 0
      %916 = vmatpush1.bf16.msra.mxu0 0
      %917 = vmatprep.mubr.bf16.mxu0 0
      %918 = vmatmul.mubr.bf16.gmra.mrb[0].mxu0 %v879
      %v919 = vpop.f32.mrb[0].mxu0
      %v920 = vadd.f32 0.0, %v919
      %v921 = vpop.f32.mrb[0].mxu0
      %v922 = vpop.f32.mrb[0].mxu0
      %v923 = vpop.f32.mrb[0].mxu0
      %924 = vdwg.mxu0
      %926 = vrot.lane.b32.xlu0 %v814, 112
      %v927 = vpop.permute.xlu0 %926
      %929 = vrot.lane.b32.xlu0 %v815, 112
      %v930 = vpop.permute.xlu0 %929
      %v932 = vsel %vm823, %v927, 0
      %v935 = vsel %vm823, %v930, 0
      %937 = vmatprep.subr.bf16.mxu0 0
      %938 = vmatpush1.bf16.xpose.msra.mxu0 %v935
      %939 = vmatprep.subr.bf16.mxu0 0
      %940 = vmatpush1.bf16.xpose.msra.mxu0 0
      %941 = vmatprep.subr.bf16.mxu0 0
      %942 = vmatpush1.bf16.xpose.msra.mxu0 0
      %943 = vmatprep.subr.bf16.mxu0 0
      %944 = vmatpush1.bf16.xpose.msra.mxu0 0
      %945 = vmatprep.subr.bf16.mxu0 0
      %946 = vmatpush1.bf16.xpose.msra.mxu0 0
      %947 = vmatprep.subr.bf16.mxu0 0
      %948 = vmatpush1.bf16.xpose.msra.mxu0 0
      %949 = vmatprep.subr.bf16.mxu0 0
      %950 = vmatpush1.bf16.xpose.msra.mxu0 0
      %951 = vmatprep.subr.bf16.mxu0 0
      %952 = vmatpush1.bf16.xpose.msra.mxu0 0
      %953 = vmatprep.subr.bf16.mxu0 0
      %954 = vmatpush1.bf16.xpose.msra.mxu0 0
      %955 = vmatprep.subr.bf16.mxu0 0
      %956 = vmatpush1.bf16.xpose.msra.mxu0 0
      %957 = vmatprep.subr.bf16.mxu0 0
      %958 = vmatpush1.bf16.xpose.msra.mxu0 0
      %959 = vmatprep.subr.bf16.mxu0 0
      %960 = vmatpush1.bf16.xpose.msra.mxu0 0
      %961 = vmatprep.subr.bf16.mxu0 0
      %962 = vmatpush1.bf16.xpose.msra.mxu0 0
      %963 = vmatprep.subr.bf16.mxu0 0
      %964 = vmatpush1.bf16.xpose.msra.mxu0 0
      %965 = vmatprep.subr.bf16.mxu0 0
      %966 = vmatpush1.bf16.xpose.msra.mxu0 0
      %967 = vmatprep.subr.bf16.mxu0 0
      %968 = vmatpush1.bf16.xpose.msra.mxu0 0
      %969 = vmatprep.mubr.bf16.mxu0 0
      %970 = vmatmul.mubr.bf16.gmra.mrb[0].mxu0 %v932
      %v971 = vpop.f32.mrb[0].mxu0
      %v972 = vadd.f32 %v821, %v971
      %v973 = vpop.f32.mrb[0].mxu0
      %v974 = vpop.f32.mrb[0].mxu0
      %v975 = vpop.f32.mrb[0].mxu0
      %976 = vdwg.mxu0
      %v977 = vxor.u32 %v972, 2147483648
      %v978 = vmul.f32 %v977, 1.442695
      %v979 = vpow.pop %v978
      %v980 = vadd.f32 %v979, 1.0
      %v981 = vrcp.pop %v980
      %v982 = vmul.f32 1.0, %v981
      %v983 = vpack.c.bf16 %v982, %v982
      %985 = vrot.lane.b32.xlu0 %v816, 112
      %v986 = vpop.permute.xlu0 %985
      %v988 = vsel %vm877, %v983, 0
      %v991 = vsel %vm881, %v986, 0
      %993 = vmatprep.subr.bf16.mxu0 0
      %994 = vmatpush1.bf16.msra.mxu0 %v991
      %995 = vmatprep.subr.bf16.mxu0 0
      %996 = vmatpush1.bf16.msra.mxu0 0
      %997 = vmatprep.subr.bf16.mxu0 0
      %998 = vmatpush1.bf16.msra.mxu0 0
      %999 = vmatprep.subr.bf16.mxu0 0
      %1000 = vmatpush1.bf16.msra.mxu0 0
      %1001 = vmatprep.subr.bf16.mxu0 0
      %1002 = vmatpush1.bf16.msra.mxu0 0
      %1003 = vmatprep.subr.bf16.mxu0 0
      %1004 = vmatpush1.bf16.msra.mxu0 0
      %1005 = vmatprep.subr.bf16.mxu0 0
      %1006 = vmatpush1.bf16.msra.mxu0 0
      %1007 = vmatprep.subr.bf16.mxu0 0
      %1008 = vmatpush1.bf16.msra.mxu0 0
      %1009 = vmatprep.subr.bf16.mxu0 0
      %1010 = vmatpush1.bf16.msra.mxu0 0
      %1011 = vmatprep.subr.bf16.mxu0 0
      %1012 = vmatpush1.bf16.msra.mxu0 0
      %1013 = vmatprep.subr.bf16.mxu0 0
      %1014 = vmatpush1.bf16.msra.mxu0 0
      %1015 = vmatprep.subr.bf16.mxu0 0
      %1016 = vmatpush1.bf16.msra.mxu0 0
      %1017 = vmatprep.subr.bf16.mxu0 0
      %1018 = vmatpush1.bf16.msra.mxu0 0
      %1019 = vmatprep.subr.bf16.mxu0 0
      %1020 = vmatpush1.bf16.msra.mxu0 0
      %1021 = vmatprep.subr.bf16.mxu0 0
      %1022 = vmatpush1.bf16.msra.mxu0 0
      %1023 = vmatprep.subr.bf16.mxu0 0
      %1024 = vmatpush1.bf16.msra.mxu0 0
      %1025 = vmatprep.mubr.bf16.mxu0 0
      %1026 = vmatmul.mubr.bf16.gmra.mrb[0].mxu0 %v988
      %v1027 = vpop.f32.mrb[0].mxu0
      %v1028 = vadd.f32 0.0, %v1027
      %v1029 = vpop.f32.mrb[0].mxu0
      %v1030 = vpop.f32.mrb[0].mxu0
      %v1031 = vpop.f32.mrb[0].mxu0
      %1032 = vdwg.mxu0
      %1034 = vrot.lane.b32.xlu0 %v1028, 16
      %v1035 = vpop.permute.xlu0 %1034
      %v1037 = vsel %vm823, %v920, %v1035
      %v1038 = vpack.c.bf16 %v1037, %v1037
      %v1039 = vlaneseq
      %v1040 = vshrl.u32 %v1039, 7
      %v1041 = vsub.s32 3, %v1040
      %v1042 = vrot.slane %v638, %v1041
      %v1047 = vunpack.c.l.b16 %v622
      %v1048 = vunpack.c.l.b16 %v623
      %v1049 = vunpack.c.l.b16 %v624
      %v1050 = vunpack.c.l.b16 %v625
      %v1051 = vpack.c.b16 %v1048, %v1047
      %v1052 = vpack.c.b16 %v1050, %v1049
      %v1056 = vsel %vm657, %v1038, 0
      %1058 = vmatprep.subr.bf16.mxu0 0
      %1059 = vmatpush1.bf16.msra.mxu0 %v1051
      %1060 = vmatprep.subr.bf16.mxu0 0
      %1061 = vmatpush1.bf16.msra.mxu0 %v1052
      %1062 = vmatprep.subr.bf16.mxu0 0
      %1063 = vmatpush1.bf16.msra.mxu0 0
      %1064 = vmatprep.subr.bf16.mxu0 0
      %1065 = vmatpush1.bf16.msra.mxu0 0
      %1066 = vmatprep.subr.bf16.mxu0 0
      %1067 = vmatpush1.bf16.msra.mxu0 0
      %1068 = vmatprep.subr.bf16.mxu0 0
      %1069 = vmatpush1.bf16.msra.mxu0 0
      %1070 = vmatprep.subr.bf16.mxu0 0
      %1071 = vmatpush1.bf16.msra.mxu0 0
      %1072 = vmatprep.subr.bf16.mxu0 0
      %1073 = vmatpush1.bf16.msra.mxu0 0
      %1074 = vmatprep.subr.bf16.mxu0 0
      %1075 = vmatpush1.bf16.msra.mxu0 0
      %1076 = vmatprep.subr.bf16.mxu0 0
      %1077 = vmatpush1.bf16.msra.mxu0 0
      %1078 = vmatprep.subr.bf16.mxu0 0
      %1079 = vmatpush1.bf16.msra.mxu0 0
      %1080 = vmatprep.subr.bf16.mxu0 0
      %1081 = vmatpush1.bf16.msra.mxu0 0
      %1082 = vmatprep.subr.bf16.mxu0 0
      %1083 = vmatpush1.bf16.msra.mxu0 0
      %1084 = vmatprep.subr.bf16.mxu0 0
      %1085 = vmatpush1.bf16.msra.mxu0 0
      %1086 = vmatprep.subr.bf16.mxu0 0
      %1087 = vmatpush1.bf16.msra.mxu0 0
      %1088 = vmatprep.subr.bf16.mxu0 0
      %1089 = vmatpush1.bf16.msra.mxu0 0
      %1090 = vmatprep.mubr.bf16.mxu0 0
      %1091 = vmatmul.mubr.bf16.gmra.mrb[0].mxu0 %v1056
      %v1092 = vpop.f32.mrb[0].mxu0
      %v1093 = vadd.f32 %v1042, %v1092
      %v1094 = vpop.f32.mrb[0].mxu0
      %v1095 = vpop.f32.mrb[0].mxu0
      %v1096 = vpop.f32.mrb[0].mxu0
      %1097 = vdwg.mxu0
      %v1098 = vadd.f32 %v1093, %v609
      %v1099 = vsel %vm657, %v1098, 0.0
      %1100 = vadd.xlane.f32.xlu0 %v1099
      %v1101 = vpop.xlane.xlu0 %1100
      %v1102 = vrcp.pop 32.0
      %v1103 = vmul.f32 %v1101, %v1102
      %v1104 = vsub.f32 %v1098, %v1103
      %v1105 = vmul.f32 %v1104, %v1104
      %v1106 = vsel %vm657, %v1105, 0.0
      %1107 = vadd.xlane.f32.xlu0 %v1106
      %v1108 = vpop.xlane.xlu0 %1107
      %v1109 = vmul.f32 %v1108, %v1102
      %v1110 = vadd.f32 %v1109, 1e-05
      %v1111 = vrsqrt.pop %v1110
      %v1112 = vmul.f32 %v1104, %v1111
      %v1113 = vlaneseq
      %v1114 = vshrl.u32 %v1113, 7
      %v1115 = vsub.s32 4, %v1114
      %v1116 = vrot.slane %v638, %v1115
      %v1117 = vmul.f32 %v1112, %v1116
      %v1118 = vlaneseq
      %v1119 = vshrl.u32 %v1118, 7
      %v1120 = vsub.s32 5, %v1119
      %v1121 = vrot.slane %v638, %v1120
      %v1122 = vadd.f32 %v1117, %v1121
      %v1123 = vpack.c.bf16 %v1122, %v1122
      %v1124 = vlaneseq
      %v1125 = vshrl.u32 %v1124, 7
      %v1126 = vsub.s32 6, %v1125
      %v1127 = vrot.slane %v638, %v1126
      %v1132 = vunpack.c.l.b16 %v626
      %v1133 = vunpack.c.l.b16 %v627
      %v1134 = vunpack.c.l.b16 %v628
      %v1135 = vunpack.c.l.b16 %v629
      %v1136 = vpack.c.b16 %v1133, %v1132
      %v1137 = vpack.c.b16 %v1135, %v1134
      %v1141 = vsel %vm657, %v1123, 0
      %1143 = vmatprep.subr.bf16.mxu0 0
      %1144 = vmatpush1.bf16.msra.mxu0 %v1136
      %1145 = vmatprep.subr.bf16.mxu0 0
      %1146 = vmatpush1.bf16.msra.mxu0 %v1137
      %1147 = vmatprep.subr.bf16.mxu0 0
      %1148 = vmatpush1.bf16.msra.mxu0 0
      %1149 = vmatprep.subr.bf16.mxu0 0
      %1150 = vmatpush1.bf16.msra.mxu0 0
      %1151 = vmatprep.subr.bf16.mxu0 0
      %1152 = vmatpush1.bf16.msra.mxu0 0
      %1153 = vmatprep.subr.bf16.mxu0 0
      %1154 = vmatpush1.bf16.msra.mxu0 0
      %1155 = vmatprep.subr.bf16.mxu0 0
      %1156 = vmatpush1.bf16.msra.mxu0 0
      %1157 = vmatprep.subr.bf16.mxu0 0
      %1158 = vmatpush1.bf16.msra.mxu0 0
      %1159 = vmatprep.subr.bf16.mxu0 0
      %1160 = vmatpush1.bf16.msra.mxu0 0
      %1161 = vmatprep.subr.bf16.mxu0 0
      %1162 = vmatpush1.bf16.msra.mxu0 0
      %1163 = vmatprep.subr.bf16.mxu0 0
      %1164 = vmatpush1.bf16.msra.mxu0 0
      %1165 = vmatprep.subr.bf16.mxu0 0
      %1166 = vmatpush1.bf16.msra.mxu0 0
      %1167 = vmatprep.subr.bf16.mxu0 0
      %1168 = vmatpush1.bf16.msra.mxu0 0
      %1169 = vmatprep.subr.bf16.mxu0 0
      %1170 = vmatpush1.bf16.msra.mxu0 0
      %1171 = vmatprep.subr.bf16.mxu0 0
      %1172 = vmatpush1.bf16.msra.mxu0 0
      %1173 = vmatprep.subr.bf16.mxu0 0
      %1174 = vmatpush1.bf16.msra.mxu0 0
      %1175 = vmatprep.mubr.bf16.mxu0 0
      %1176 = vmatmul.mubr.bf16.gmra.mrb[0].mxu0 %v1141
      %v1177 = vpop.f32.mrb[0].mxu0
      %v1178 = vadd.f32 %v1127, %v1177
      %v1179 = vpop.f32.mrb[0].mxu0
      %v1180 = vpop.f32.mrb[0].mxu0
      %v1181 = vpop.f32.mrb[0].mxu0
      %1182 = vdwg.mxu0
      %v1183 = vmul.f32 %v1178, 0.5
      %v1184 = vmul.f32 %v1178, 0.70710677
      %v1185 = verf.f32.pop %v1184
      %v1186 = vadd.f32 %v1185, 1.0
      %v1187 = vmul.f32 %v1183, %v1186
      %v1188 = vpack.c.bf16 %v1187, %v1187
      %v1189 = vlaneseq
      %v1190 = vshrl.u32 %v1189, 7
      %v1191 = vsub.s32 7, %v1190
      %v1192 = vrot.slane %v638, %v1191
      %v1201 = vunpack.c.l.b16 %v630
      %v1202 = vunpack.c.l.b16 %v631
      %v1203 = vunpack.c.l.b16 %v632
      %v1204 = vunpack.c.l.b16 %v633
      %v1205 = vunpack.c.l.b16 %v634
      %v1206 = vunpack.c.l.b16 %v635
      %v1207 = vunpack.c.l.b16 %v636
      %v1208 = vunpack.c.l.b16 %v637
      %v1209 = vpack.c.b16 %v1202, %v1201
      %v1210 = vpack.c.b16 %v1204, %v1203
      %v1211 = vpack.c.b16 %v1206, %v1205
      %v1212 = vpack.c.b16 %v1208, %v1207
      %vm1217 = vcmask 523264
      %v1219 = vsel %vm1217, %v1188, 0
      %1221 = vmatprep.subr.bf16.mxu0 0
      %1222 = vmatpush1.bf16.msra.mxu0 %v1209
      %1223 = vmatprep.subr.bf16.mxu0 0
      %1224 = vmatpush1.bf16.msra.mxu0 %v1210
      %1225 = vmatprep.subr.bf16.mxu0 0
      %1226 = vmatpush1.bf16.msra.mxu0 %v1211
      %1227 = vmatprep.subr.bf16.mxu0 0
      %1228 = vmatpush1.bf16.msra.mxu0 %v1212
      %1229 = vmatprep.subr.bf16.mxu0 0
      %1230 = vmatpush1.bf16.msra.mxu0 0
      %1231 = vmatprep.subr.bf16.mxu0 0
      %1232 = vmatpush1.bf16.msra.mxu0 0
      %1233 = vmatprep.subr.bf16.mxu0 0
      %1234 = vmatpush1.bf16.msra.mxu0 0
      %1235 = vmatprep.subr.bf16.mxu0 0
      %1236 = vmatpush1.bf16.msra.mxu0 0
      %1237 = vmatprep.subr.bf16.mxu0 0
      %1238 = vmatpush1.bf16.msra.mxu0 0
      %1239 = vmatprep.subr.bf16.mxu0 0
      %1240 = vmatpush1.bf16.msra.mxu0 0
      %1241 = vmatprep.subr.bf16.mxu0 0
      %1242 = vmatpush1.bf16.msra.mxu0 0
      %1243 = vmatprep.subr.bf16.mxu0 0
      %1244 = vmatpush1.bf16.msra.mxu0 0
      %1245 = vmatprep.subr.bf16.mxu0 0
      %1246 = vmatpush1.bf16.msra.mxu0 0
      %1247 = vmatprep.subr.bf16.mxu0 0
      %1248 = vmatpush1.bf16.msra.mxu0 0
      %1249 = vmatprep.subr.bf16.mxu0 0
      %1250 = vmatpush1.bf16.msra.mxu0 0
      %1251 = vmatprep.subr.bf16.mxu0 0
      %1252 = vmatpush1.bf16.msra.mxu0 0
      %1253 = vmatprep.mubr.bf16.mxu0 0
      %1254 = vmatmul.mubr.bf16.gmra.mrb[0].mxu0 %v1219
      %v1255 = vpop.f32.mrb[0].mxu0
      %v1256 = vadd.f32 %v1192, %v1255
      %v1257 = vpop.f32.mrb[0].mxu0
      %v1258 = vpop.f32.mrb[0].mxu0
      %v1259 = vpop.f32.mrb[0].mxu0
      %1260 = vdwg.mxu0
      %v1261 = vadd.f32 %v1256, %v1122
      %v1262 = vsel %vm657, %v1261, 0.0
      %1263 = vadd.xlane.f32.xlu0 %v1262
      %v1264 = vpop.xlane.xlu0 %1263
      %v1265 = vmul.f32 %v1264, %v1102
      %v1266 = vsub.f32 %v1261, %v1265
      %v1267 = vmul.f32 %v1266, %v1266
      %v1268 = vsel %vm657, %v1267, 0.0
      %1269 = vadd.xlane.f32.xlu0 %v1268
      %v1270 = vpop.xlane.xlu0 %1269
      %v1271 = vmul.f32 %v1270, %v1102
      %v1272 = vadd.f32 %v1271, 1e-05
      %v1273 = vrsqrt.pop %v1272
      %v1274 = vmul.f32 %v1266, %v1273
      %v1275 = vlaneseq
      %v1276 = vshrl.u32 %v1275, 7
      %v1277 = vsub.s32 0, %v1276
      %v1278 = vrot.slane %v639, %v1277
      %v1279 = vmul.f32 %v1274, %v1278
      %v1280 = vlaneseq
      %v1281 = vshrl.u32 %v1280, 7
      %v1282 = vsub.s32 1, %v1281
      %v1283 = vrot.slane %v639, %v1282
      %v1284 = vadd.f32 %v1279, %v1283
      %1285 = vst.msk [vmem:[#allocation2] sm:$0xff] %vm657, %v1284
      %p1286 = scmp.eq.s32.totalorder %s28, 1
      // Predicated region
      $region73: #{forward.1} parent=67 // pred_check
        %p1287 = pneg %p1286
      $region74: #{forward.1} parent=67 // pred_check_branch
        %1289 = sbr.rel (%p1287) target = $region76
      $region75: #{forward.1} parent=67 // pred_region
        %v1290 = vpack.c.bf16 %v1284, %v1284
        %v1291 = vld [vmem:[%s10] sm:$0xf]
        %v1292 = vld [vmem:[%s10 + $0x4] sm:$0xf]
        %v1293 = vld [vmem:[%s10 + $0x8] sm:$0xf]
        %v1294 = vld [vmem:[%s10 + $0xc] sm:$0xf]
        %v1295 = vld [vmem:[%s11] sm:$0x1]
        %v1297 = vlaneseq
        %v1298 = vshrl.u32 %v1297, 7
        %v1299 = vsub.s32 0, %v1298
        %v1300 = vrot.slane %v1295, %v1299
        %v1306 = vunpack.c.l.b16 %v1291
        %v1307 = vunpack.c.l.b16 %v1292
        %v1308 = vunpack.c.l.b16 %v1293
        %v1309 = vunpack.c.l.b16 %v1294
        %v1310 = vpack.c.b16 %v1307, %v1306
        %v1311 = vpack.c.b16 %v1309, %v1308
        %v1315 = vsel %vm657, %v1290, 0
        %1317 = vmatprep.subr.bf16.mxu0 0
        %1318 = vmatpush1.bf16.msra.mxu0 %v1310
        %1319 = vmatprep.subr.bf16.mxu0 0
        %1320 = vmatpush1.bf16.msra.mxu0 %v1311
        %1321 = vmatprep.subr.bf16.mxu0 0
        %1322 = vmatpush1.bf16.msra.mxu0 0
        %1323 = vmatprep.subr.bf16.mxu0 0
        %1324 = vmatpush1.bf16.msra.mxu0 0
        %1325 = vmatprep.subr.bf16.mxu0 0
        %1326 = vmatpush1.bf16.msra.mxu0 0
        %1327 = vmatprep.subr.bf16.mxu0 0
        %1328 = vmatpush1.bf16.msra.mxu0 0
        %1329 = vmatprep.subr.bf16.mxu0 0
        %1330 = vmatpush1.bf16.msra.mxu0 0
        %1331 = vmatprep.subr.bf16.mxu0 0
        %1332 = vmatpush1.bf16.msra.mxu0 0
        %1333 = vmatprep.subr.bf16.mxu0 0
        %1334 = vmatpush1.bf16.msra.mxu0 0
        %1335 = vmatprep.subr.bf16.mxu0 0
        %1336 = vmatpush1.bf16.msra.mxu0 0
        %1337 = vmatprep.subr.bf16.mxu0 0
        %1338 = vmatpush1.bf16.msra.mxu0 0
        %1339 = vmatprep.subr.bf16.mxu0 0
        %1340 = vmatpush1.bf16.msra.mxu0 0
        %1341 = vmatprep.subr.bf16.mxu0 0
        %1342 = vmatpush1.bf16.msra.mxu0 0
        %1343 = vmatprep.subr.bf16.mxu0 0
        %1344 = vmatpush1.bf16.msra.mxu0 0
        %1345 = vmatprep.subr.bf16.mxu0 0
        %1346 = vmatpush1.bf16.msra.mxu0 0
        %1347 = vmatprep.subr.bf16.mxu0 0
        %1348 = vmatpush1.bf16.msra.mxu0 0
        %1349 = vmatprep.mubr.bf16.mxu0 0
        %1350 = vmatmul.mubr.bf16.gmra.mrb[0].mxu0 %v1315
        %v1351 = vpop.f32.mrb[0].mxu0
        %v1352 = vadd.f32 %v1300, %v1351
        %v1353 = vpop.f32.mrb[0].mxu0
        %v1354 = vpop.f32.mrb[0].mxu0
        %v1355 = vpop.f32.mrb[0].mxu0
        %1356 = vdwg.mxu0
        %1357 = vst [vmem:[%s574] sm:$0xff] %v1352
      $region76: #{forward.1} parent=67 // pred_fallthru
        _
      %p1358 = scmp.lt.s32.totalorder %s27, 1
      %s1359 = scalar_select %p1358, %s27, 1
      %s1360 = smul.addr %s1359, 8
      %s1361 = scalar_lea.vmem %s12, %s1360
      // Predicated region
      $region77: #{forward.1} parent=67 // pred_check
        %p1362 = pneg %p350
      $region78: #{forward.1} parent=67 // pred_check_branch
        %1364 = sbr.rel (%p1362) target = $region80
      $region79: #{forward.1} parent=67 // pred_region
        _
      $region80: #{forward.1} parent=67 // pred_fallthru
        _
    $region68: #{forward.1} parent=5 // pred_fallthru
      _
    %p1365 = scmp.le.s32.totalorder 2, %s18
    // Predicated region
    $region81: #{forward.1} parent=5 // pred_check
      %p1366 = pneg %p1365
    $region82: #{forward.1} parent=5 // pred_check_branch
      %1368 = sbr.rel (%p1366) target = $region84
    $region83: #{forward.1} parent=5 // pred_region
      %s1369 = ssub.s32 %s18, 2
      // Predicated region
      $region85: #{forward.1} parent=83 // pred_check
        %p1370 = pneg %p356
      $region86: #{forward.1} parent=83 // pred_check_branch
        %1372 = sbr.rel (%p1370) target = $region88
      $region87: #{forward.1} parent=83 // pred_region
        %p1373 = scmp.lt.s32.totalorder %s29, 1
        %s1374 = scalar_select %p1373, %s29, 1
        %s1375 = smul.addr %s1374, 8
        %s1376 = scalar_lea.vmem %s12, %s1375
      $region88: #{forward.1} parent=83 // pred_fallthru
        _
    $region84: #{forward.1} parent=5 // pred_fallthru
      _
  $region6: #{forward.1} parent=0 // loop_footer
    %s22 = sadd.s32 1, %s18
  $region7: #{forward.1} parent=0 // loop_footer_branch
    %17 = sbr.rel target = $region3
  $region8: #{forward.1} parent=0 // loop_exit
    _

</llo_original>
